<compile_context>
chip_gen: v7x
topology: tpu7x:2x2x1
jax: 0.10.0
libtpu: 0.0.40
codegen_flags: <defaults>
</compile_context>

<pallas_src>
import functools

import jax
import jax.numpy as jnp
from jax.experimental import pallas as pl
from jax.experimental.pallas import tpu as pltpu


def layernorm_kernel(x_ref, gamma_ref, beta_ref, o_ref, *, eps, d_hid):
    x = x_ref[...].astype(jnp.float32)                       # (TR, D)
    mu = jnp.mean(x, axis=-1, keepdims=True)                  # (TR, 1)
    x = x - mu                                                 # reuse buffer (centered)
    # torch.std default is unbiased (ddof=1): divide by (D - 1).
    inv_denom = 1.0 / max(d_hid - 1, 1)
    var = jnp.sum(x * x, axis=-1, keepdims=True) * inv_denom
    # eps added to std (matches the PyTorch module); approx=False keeps f32 accuracy.
    inv = pl.reciprocal(jnp.sqrt(var) + eps, approx=False)     # (TR, 1)
    y = x * inv
    # gamma/beta arrive already cast to f32 by the wrapper.
    o_ref[...] = (y * gamma_ref[...] + beta_ref[...]).astype(o_ref.dtype)


def _sublane_pack(dtype):
    itemsize = jnp.dtype(dtype).itemsize
    if itemsize >= 4:
        return 8
    if itemsize == 2:
        return 16
    return 32


def _tpu_topology():
    """(vmem_capacity_bytes, num_tensorcores) with safe fallbacks."""
    vmem = 64 * 1024 * 1024        # conservative default = v7x per-TC VMEM
    num_tc = 2
    try:
        info = pltpu.get_tpu_info()
        vmem = int(getattr(info, "vmem_capacity_bytes", vmem))
        num_tc = None
        for name in ("num_cores", "num_tensorcores", "tensorcore_count", "cores_per_chip"):
            if hasattr(info, name):
                try:
                    num_tc = int(getattr(info, name))
                    break
                except Exception:
                    num_tc = None
        if not num_tc or num_tc < 1:
            # Heuristic: 64 MiB/TC parts (v7x) have 2 TCs; 128 MiB parts (v5e/v6e) have 1.
            num_tc = 2 if vmem <= 64 * 1024 * 1024 else 1
    except Exception:
        pass
    return vmem, num_tc


def _pick_row_tile(R, D, dtype, vmem_cap, num_tc):
    """Biggest sublane-aligned row block that fits VMEM, bytes-targeted, TC-balanced."""
    sub = _sublane_pack(dtype)
    if R <= sub:
        return R                                   # full-extent block (allowed even < 8)
    itemsize = jnp.dtype(dtype).itemsize

    if vmem_cap <= 64 * 1024 * 1024:               # v7x-class: 64 MiB, keep slack
        target_block_bytes = 8 << 20
        headroom = 0.6
    else:                                          # v5e/v6e-class: 128 MiB
        target_block_bytes = 14 << 20
        headroom = 0.75

    # Per-row VMEM footprint: double-buffered input + output blocks, plus ~2
    # live f32 temporaries (centered x, scaled result).
    per_row = 2 * 2 * D * itemsize + 2 * D * 4
    budget_rows = int(vmem_cap * headroom) // max(per_row, 1)
    target_rows = max(1, target_block_bytes // max(D * itemsize, 1))
    rt = min(budget_rows, target_rows)
    rt = max(sub, (rt // sub) * sub)

    # Never meaningfully larger than the (sublane-padded) array itself.
    r_ceil = ((R + sub - 1) // sub) * sub
    rt = min(rt, r_ceil)

    # Balance few grid steps across TensorCores (v7x has 2); single-TC parts
    # keep the whole-tensor block when it fits.
    if num_tc > 1:
        steps = pl.cdiv(R, rt)
        if steps < 8 and steps % num_tc != 0:
            want_steps = ((steps + num_tc - 1) // num_tc) * num_tc
            rt_bal = ((pl.cdiv(R, want_steps) + sub - 1) // sub) * sub
            rt_bal = max(sub, min(rt_bal, r_ceil))
            if pl.cdiv(R, rt_bal) % num_tc == 0:
                rt = rt_bal
    return rt


def _layernorm_jnp(z, a_2, b_2, eps):
    """Pure-JAX path (f32 math) for tiny / lane-underfilled inputs."""
    zf = z.astype(jnp.float32)
    mu = jnp.mean(zf, axis=-1, keepdims=True)
    sigma = jnp.std(zf, axis=-1, keepdims=True, ddof=1)
    y = (zf - mu) / (sigma + eps)
    y = y * a_2.astype(jnp.float32) + b_2.astype(jnp.float32)
    return y.astype(z.dtype)


def layer_normalization(z, a_2, b_2, eps=0.001, row_tile=None):
    """Pallas implementation of LayerNormalization.forward for 3-D inputs (B, S, D)."""
    # PyTorch: if z.size(1) == 1: return z  (static shape check -> plain Python)
    if z.shape[1] == 1:
        return z

    B, S, D = z.shape
    R = B * S
    itemsize = jnp.dtype(z.dtype).itemsize

    # Fallback: D < 128 underfills lanes (masked vst path, 4x slower stores) and
    # tiny tensors are dominated by launch + pipeline overhead -> XLA-fused LN wins.
    if D < 128 or (R * D * itemsize) < (256 << 10):
        return _layernorm_jnp(z, a_2, b_2, float(eps))

    x = z.reshape(R, D)                            # no padding copy: cdiv grid + OOB-padded last block

    vmem_cap, num_tc = _tpu_topology()
    if row_tile is None:
        row_tile = _pick_row_tile(R, D, z.dtype, vmem_cap, num_tc)

    gamma = a_2.reshape(1, D).astype(jnp.float32)  # f32 cast hoisted out of the kernel
    beta = b_2.reshape(1, D).astype(jnp.float32)

    # Explicit VMEM budget: double-buffered in/out blocks + f32 temporaries + params + slack.
    block_bytes = row_tile * D * itemsize
    needed = (2 * (block_bytes + block_bytes)        # double-buffered x + out
              + 2 * row_tile * D * 4                 # live f32 temporaries
              + 2 * 2 * D * 4                        # gamma/beta (double-buffered)
              + (4 << 20))                           # compiler internal slack
    vmem_limit = int(min(max(needed, 32 << 20), int(vmem_cap * 0.95)))

    cost = pl.CostEstimate(
        flops=8 * R * D,            # mean, center, square, scale, affine
        transcendentals=2 * R,      # sqrt + reciprocal per row
        bytes_accessed=2 * R * D * itemsize + 2 * D * 4,
    )

    out = pl.pallas_call(
        functools.partial(layernorm_kernel, eps=float(eps), d_hid=D),
        out_shape=jax.ShapeDtypeStruct((R, D), z.dtype),
        grid_spec=pltpu.PrefetchScalarGridSpec(
            num_scalar_prefetch=0,
            grid=(pl.cdiv(R, row_tile),),
            in_specs=[
                pl.BlockSpec((row_tile, D), lambda i: (i, 0)),   # x rows
                pl.BlockSpec((1, D), lambda i: (0, 0)),          # a_2 (gamma), broadcast
                pl.BlockSpec((1, D), lambda i: (0, 0)),          # b_2 (beta), broadcast
            ],
            out_specs=pl.BlockSpec((row_tile, D), lambda i: (i, 0)),
        ),
        compiler_params=pltpu.CompilerParams(
            dimension_semantics=("parallel",),
            vmem_limit_bytes=vmem_limit,
        ),
        cost_estimate=cost,
    )(x, gamma, beta)

    return out.reshape(B, S, D)


def layer_normalization_ref(z, a_2, b_2, eps=0.001):
    """Pure-JAX reference mirroring the PyTorch module (unbiased std, eps on std)."""
    if z.shape[1] == 1:
        return z
    zf = z.astype(jnp.float32)
    mu = jnp.mean(zf, axis=-1, keepdims=True)
    sigma = jnp.std(zf, axis=-1, keepdims=True, ddof=1)
    y = (zf - mu) / (sigma + eps)
    y = y * a_2.astype(jnp.float32) + b_2.astype(jnp.float32)
    return y.astype(z.dtype)


if __name__ == "__main__":
    key = jax.random.PRNGKey(0)

    # (2, 8, 32): primary module shape (batch=2, seq=8, d_hid=32) -> tiny-input
    # jnp fallback.  The other shapes exercise the Pallas path, including a
    # non-sublane-multiple row count (masked/OOB-padded last block) and bf16
    # (sublane pack 16, R not a multiple of 16).
    tests = [
        ((2, 8, 32), jnp.float32),
        ((4, 300, 256), jnp.float32),
        ((3, 5, 128), jnp.float32),
        ((5, 37, 256), jnp.bfloat16),
    ]

    for idx, ((B, S, D), dt) in enumerate(tests):
        k = jax.random.fold_in(key, idx)
        z = jax.random.normal(k, (B, S, D), dtype=jnp.float32).astype(dt)

        # deterministic parameter init (matches nn.Parameter(torch.ones/zeros(d_hid)))
        a_2 = jnp.ones((D,), dtype=jnp.float32)
        b_2 = jnp.zeros((D,), dtype=jnp.float32)

        out = jax.block_until_ready(layer_normalization(z, a_2, b_2, eps=0.001))
        ref = layer_normalization_ref(z, a_2, b_2, eps=0.001)

        assert out.shape == ref.shape, f"shape mismatch for {(B, S, D)}"
        tol = 1e-5 if dt == jnp.float32 else 2e-2
        assert jnp.allclose(out.astype(jnp.float32), ref.astype(jnp.float32),
                            atol=tol, rtol=tol), f"mismatch vs reference for {(B, S, D)} {dt}"

    print("KERNEL_OK")
</pallas_src>

<mosaic_0001>
module attributes {stable_mosaic.version = 11 : i64} {
  func.func @layernorm_kernel(%arg0: i32, %arg1: memref<600x256xf32, #tpu.memory_space<vmem>>, %arg2: memref<1x256xf32, #tpu.memory_space<vmem>>, %arg3: memref<1x256xf32, #tpu.memory_space<vmem>>, %arg4: memref<600x256xf32, #tpu.memory_space<vmem>>) attributes {dimension_semantics = [#tpu.dimension_semantics<parallel>], iteration_bounds = array<i64: 2>, scalar_prefetch = 0 : i64, scratch_operands = 0 : i64, tpu.core_type = #tpu.core_type<tc>, window_params = [{transform_indices = @transform_0, window_bounds = array<i64: 600, 256>}, {pipeline_mode = #tpu.pipeline_mode<synchronous>, transform_indices = @transform_1, window_bounds = array<i64: 1, 256>}, {pipeline_mode = #tpu.pipeline_mode<synchronous>, transform_indices = @transform_2, window_bounds = array<i64: 1, 256>}, {transform_indices = @transform_3, window_bounds = array<i64: 600, 256>}]} {
    %c0 = arith.constant 0 : index
    %c0_0 = arith.constant 0 : index
    %0 = vector.load %arg1[%c0, %c0_0] : memref<600x256xf32, #tpu.memory_space<vmem>>, vector<600x256xf32>
    %cst = arith.constant dense<0.000000e+00> : vector<600xf32>
    %1 = vector.multi_reduction <add>, %0, %cst [1] : vector<600x256xf32> to vector<600xf32>
    %2 = vector.shape_cast %1 : vector<600xf32> to vector<600x1xf32>
    %cst_1 = arith.constant 2.560000e+02 : f32
    %3 = vector.broadcast %cst_1 : f32 to vector<600x1xf32>
    %4 = arith.divf %2, %3 : vector<600x1xf32>
    %5 = vector.broadcast %4 : vector<600x1xf32> to vector<600x256xf32>
    %6 = arith.subf %0, %5 : vector<600x256xf32>
    %7 = arith.mulf %6, %6 : vector<600x256xf32>
    %cst_2 = arith.constant dense<0.000000e+00> : vector<600xf32>
    %8 = vector.multi_reduction <add>, %7, %cst_2 [1] : vector<600x256xf32> to vector<600xf32>
    %9 = vector.shape_cast %8 : vector<600xf32> to vector<600x1xf32>
    %cst_3 = arith.constant 0.00392156886 : f32
    %10 = vector.broadcast %cst_3 : f32 to vector<600x1xf32>
    %11 = arith.mulf %9, %10 : vector<600x1xf32>
    %12 = math.sqrt %11 : vector<600x1xf32>
    %cst_4 = arith.constant 1.000000e-03 : f32
    %13 = vector.broadcast %cst_4 : f32 to vector<600x1xf32>
    %14 = arith.addf %12, %13 : vector<600x1xf32>
    %15 = tpu.reciprocal %14 : vector<600x1xf32> -> vector<600x1xf32>
    %16 = vector.broadcast %15 : vector<600x1xf32> to vector<600x256xf32>
    %17 = arith.mulf %6, %16 : vector<600x256xf32>
    %c0_5 = arith.constant 0 : index
    %c0_6 = arith.constant 0 : index
    %18 = vector.load %arg2[%c0_5, %c0_6] : memref<1x256xf32, #tpu.memory_space<vmem>>, vector<1x256xf32>
    %19 = vector.broadcast %18 : vector<1x256xf32> to vector<600x256xf32>
    %20 = arith.mulf %17, %19 : vector<600x256xf32>
    %c0_7 = arith.constant 0 : index
    %c0_8 = arith.constant 0 : index
    %21 = vector.load %arg3[%c0_7, %c0_8] : memref<1x256xf32, #tpu.memory_space<vmem>>, vector<1x256xf32>
    %22 = vector.broadcast %21 : vector<1x256xf32> to vector<600x256xf32>
    %23 = arith.addf %20, %22 : vector<600x256xf32>
    %c0_9 = arith.constant 0 : index
    %c0_10 = arith.constant 0 : index
    %24 = vector.load %arg4[%c0_9, %c0_10] : memref<600x256xf32, #tpu.memory_space<vmem>>, vector<600x256xf32>
    tpu.vector_store %arg4[%c0_9, %c0_10], %23 {strides = array<i32>} : memref<600x256xf32, #tpu.memory_space<vmem>>, vector<600x256xf32>,
    return
  }
  func.func @transform_0(%arg0: i32) -> (i32, i32) {
    %c0_i32 = arith.constant 0 : i32
    %c0_i32_0 = arith.constant 0 : i32
    return %arg0, %c0_i32 : i32, i32
  }
  func.func @transform_1(%arg0: i32) -> (i32, i32) {
    %c0_i32 = arith.constant 0 : i32
    %c0_i32_0 = arith.constant 0 : i32
    %c0_i32_1 = arith.constant 0 : i32
    return %c0_i32, %c0_i32_0 : i32, i32
  }
  func.func @transform_2(%arg0: i32) -> (i32, i32) {
    %c0_i32 = arith.constant 0 : i32
    %c0_i32_0 = arith.constant 0 : i32
    %c0_i32_1 = arith.constant 0 : i32
    return %c0_i32, %c0_i32_0 : i32, i32
  }
  func.func @transform_3(%arg0: i32) -> (i32, i32) {
    %c0_i32 = arith.constant 0 : i32
    %c0_i32_0 = arith.constant 0 : i32
    return %arg0, %c0_i32 : i32, i32
  }
}

</mosaic_0001>

<llo_original>
// kernel: tpu_custom_call.1
$region0: #{tpu_custom_call.1}
  #allocation0 [shape = 'u32[]', space=smem, size = 0x4, offset = 0x4, fixed_abs, tag = 'smem constant byte address 0x4 - core index']
  #allocation1 [shape = 'u32[144,128]{1,0:T(1,128)}', space=vmem, size = 0x12000, scoped, tag = 'internal scratch']
  %s0 = inlined_call_operand.hbm [shape: f32[1200,256], index: 0, kind: input, shape index: {}]
  %s1 = inlined_call_operand.hbm [shape: f32[1,256], index: 1, kind: input, shape index: {}]
  %s2 = inlined_call_operand.hbm [shape: f32[1,256], index: 2, kind: input, shape index: {}]
  %s3 = inlined_call_operand.hbm [shape: f32[1200,256], index: 3, kind: output, shape index: {}]
  %s4 = sld [smem:[#allocation0]]
  $region57: #{tpu_custom_call.1} parent=0
    _
  %s6 = ssub.s32 1, %s4
  %s7 = scalar_select 0, %s6, %s4
  $region1: #{tpu_custom_call.1} parent=0
    #allocation2 [shape = 'u8[1228800]{0}', space=vmem, size = 0x12c000, scoped, tag = 'input window, operand 0']
    #allocation3 [shape = 's32[2]{0}', space=sflag, size = 0x8, scoped, tag = 'scoped memory for tpu_custom_call.1']
    #allocation4 [shape = 's32[2]{0}', space=sflag, size = 0x8, scoped, tag = 'scoped memory for tpu_custom_call.1']
    #allocation5 [shape = 'u8[1024]{0}', space=vmem, size = 0x400, scoped, tag = 'input window, operand 1, single buffered']
    #allocation6 [shape = 's32[1]{0}', space=sflag, size = 0x4, scoped, tag = 'scoped memory for tpu_custom_call.1']
    #allocation7 [shape = 'u8[1024]{0}', space=vmem, size = 0x400, scoped, tag = 'input window, operand 2, single buffered']
    #allocation8 [shape = 'u8[1228800]{0}', space=vmem, size = 0x12c000, scoped, tag = 'output window, operand 0']
    %8 = vsyncpa [#allocation3], 0
    %s9 = scalar_lea.sflag [#allocation3], 1
    %10 = vsyncpa %s9, 0
    %11 = vsyncpa [#allocation6], 0
    %12 = vsyncpa [#allocation4], 0
    %s13 = scalar_lea.sflag [#allocation4], 1
    %14 = vsyncpa %s13, 0
    loop: start=0, step=1, limit=4
    $region2: #{tpu_custom_call.1} parent=1 // loop_pre_header
      _
    $region3: #{tpu_custom_call.1} parent=1 // loop_header
      %s16 = sphi 0, %s20
      %p17 = scmp.ge.s32.totalorder %s16, 4
      %s26 = sphi 0, %s28
      %s29 = sphi 0, %s26
      %s30 = sphi 0, %s29
      %s46 = sphi 0, %s30
      %s50 = sphi 0, %s50
      %s52 = sphi 0, %s50
      %s53 = sphi 0, %s52
      %s67 = sphi 0, %s53
      %s71 = sphi 0, %s71
      %s73 = sphi 0, %s71
      %s74 = sphi 0, %s73
      %s88 = sphi 0, %s74
      %s94 = sphi 0, %s96
      %s97 = sphi 0, %s94
      %s98 = sphi 0, %s97
      %s114 = sphi 0, %s98
    $region4: #{tpu_custom_call.1} parent=1 // loop_header_branch
      %19 = sbr.rel (%p17) target = $region8
    $region5: #{tpu_custom_call.1} parent=1 // loop_body
      %s21 = ssub.s32 %s16, 1
      %s22 = ssub.s32 %s16, 2
      %s23 = sadd.s32 %s16, 1
      %s24 = ssub.s32 %s16, %s23
      %p25 = scmp.eq.s32.totalorder %s24, 0
      %s27 = sadd.s32 %s26, 1
      %s28 = scalar_select %p25, %s26, %s27
      %p31 = pneg %p25
      %p32 = scmp.eq.s32.totalorder %s16, 1
      %p33 = por %p31, %p32
      %p34 = scmp.ne.s32.totalorder %s26, %s29
      %p35 = scmp.eq.s32.totalorder %s16, 0
      %p36 = por %p34, %p35
      %p37 = scmp.ne.s32.totalorder %s26, %s29
      %p38 = scmp.eq.s32.totalorder %s21, 1
      %p39 = por %p37, %p38
      %p40 = scmp.ne.s32.totalorder %s29, %s30
      %p41 = scmp.eq.s32.totalorder %s21, 0
      %p42 = por %p40, %p41
      %p43 = scmp.ne.s32.totalorder %s29, %s30
      %p44 = scmp.eq.s32.totalorder %s22, 1
      %p45 = por %p43, %p44
      %p47 = scmp.ne.s32.totalorder %s30, %s46
      %p48 = scmp.eq.s32.totalorder %s22, 0
      %p49 = por %p47, %p48
      %s51 = sadd.s32 %s50, 1
      %p54 = scmp.eq.s32.totalorder %s16, 1
      %p55 = scmp.ne.s32.totalorder %s50, %s52
      %p56 = scmp.eq.s32.totalorder %s16, 0
      %p57 = por %p55, %p56
      %p58 = scmp.ne.s32.totalorder %s50, %s52
      %p59 = scmp.eq.s32.totalorder %s21, 1
      %p60 = por %p58, %p59
      %p61 = scmp.ne.s32.totalorder %s52, %s53
      %p62 = scmp.eq.s32.totalorder %s21, 0
      %p63 = por %p61, %p62
      %p64 = scmp.ne.s32.totalorder %s52, %s53
      %p65 = scmp.eq.s32.totalorder %s22, 1
      %p66 = por %p64, %p65
      %p68 = scmp.ne.s32.totalorder %s53, %s67
      %p69 = scmp.eq.s32.totalorder %s22, 0
      %p70 = por %p68, %p69
      %s72 = sadd.s32 %s71, 1
      %p75 = scmp.eq.s32.totalorder %s16, 1
      %p76 = scmp.ne.s32.totalorder %s71, %s73
      %p77 = scmp.eq.s32.totalorder %s16, 0
      %p78 = por %p76, %p77
      %p79 = scmp.ne.s32.totalorder %s71, %s73
      %p80 = scmp.eq.s32.totalorder %s21, 1
      %p81 = por %p79, %p80
      %p82 = scmp.ne.s32.totalorder %s73, %s74
      %p83 = scmp.eq.s32.totalorder %s21, 0
      %p84 = por %p82, %p83
      %p85 = scmp.ne.s32.totalorder %s73, %s74
      %p86 = scmp.eq.s32.totalorder %s22, 1
      %p87 = por %p85, %p86
      %p89 = scmp.ne.s32.totalorder %s74, %s88
      %p90 = scmp.eq.s32.totalorder %s22, 0
      %p91 = por %p89, %p90
      %s92 = ssub.s32 %s16, %s23
      %p93 = scmp.eq.s32.totalorder %s92, 0
      %s95 = sadd.s32 %s94, 1
      %s96 = scalar_select %p93, %s94, %s95
      %p99 = pneg %p93
      %p100 = scmp.eq.s32.totalorder %s16, 1
      %p101 = por %p99, %p100
      %p102 = scmp.ne.s32.totalorder %s94, %s97
      %p103 = scmp.eq.s32.totalorder %s16, 0
      %p104 = por %p102, %p103
      %p105 = scmp.ne.s32.totalorder %s94, %s97
      %p106 = scmp.eq.s32.totalorder %s21, 1
      %p107 = por %p105, %p106
      %p108 = scmp.ne.s32.totalorder %s97, %s98
      %p109 = scmp.eq.s32.totalorder %s21, 0
      %p110 = por %p108, %p109
      %p111 = scmp.ne.s32.totalorder %s97, %s98
      %p112 = scmp.eq.s32.totalorder %s22, 1
      %p113 = por %p111, %p112
      %p115 = scmp.ne.s32.totalorder %s98, %s114
      %p116 = scmp.eq.s32.totalorder %s22, 0
      %p117 = por %p115, %p116
      %p118 = scmp.le.s32.totalorder 1, %s16
      %p119 = scmp.lt.s32.totalorder %s16, 3
      %p120 = pnand %p118, %p119
      %p121 = pneg %p120
      // Predicated region
      $region9: #{tpu_custom_call.1} parent=5 // pred_check
        _
      $region10: #{tpu_custom_call.1} parent=5 // pred_check_branch
        %123 = sbr.rel (%p120) target = $region12
      $region11: #{tpu_custom_call.1} parent=5 // pred_region
        %s124 = ssub.s32 %s16, 1
        // Predicated region
        $region13: #{tpu_custom_call.1} parent=11 // pred_check
          %p125 = pneg %p63
        $region14: #{tpu_custom_call.1} parent=11 // pred_check_branch
          %127 = sbr.rel (%p125) target = $region16
        $region15: #{tpu_custom_call.1} parent=11 // pred_region
          %s129 = ssub.s32 32, 32
          %130 = vsyncadd [#allocation6], %s129
          %s132 = sshll.u32 [#allocation5], 4
          %s133 = int_to_ptr.vmem [resolvable:$true] %s132
          %135 = dma.hbm_to_vmem [thread:$0]  %s1, 32, %s133, [#allocation6]
        $region16: #{tpu_custom_call.1} parent=11 // pred_fallthru
          _
        // Predicated region
        $region17: #{tpu_custom_call.1} parent=11 // pred_check
          %p136 = pneg %p84
        $region18: #{tpu_custom_call.1} parent=11 // pred_check_branch
          %138 = sbr.rel (%p136) target = $region20
        $region19: #{tpu_custom_call.1} parent=11 // pred_region
          %s140 = ssub.s32 32, 32
          %141 = vsyncadd [#allocation6], %s140
          %s143 = sshll.u32 [#allocation7], 4
          %s144 = int_to_ptr.vmem [resolvable:$true] %s143
          %146 = dma.hbm_to_vmem [thread:$0]  %s2, 32, %s144, [#allocation6]
        $region20: #{tpu_custom_call.1} parent=11 // pred_fallthru
          _
      $region12: #{tpu_custom_call.1} parent=5 // pred_fallthru
        _
      %p147 = scmp.lt.s32.totalorder %s16, 2
      // Predicated region
      $region21: #{tpu_custom_call.1} parent=5 // pred_check
        %p148 = pneg %p147
      $region22: #{tpu_custom_call.1} parent=5 // pred_check_branch
        %150 = sbr.rel (%p148) target = $region24
      $region23: #{tpu_custom_call.1} parent=5 // pred_region
        // Predicated region
        $region25: #{tpu_custom_call.1} parent=23 // pred_check
          %p151 = pneg %p36
        $region26: #{tpu_custom_call.1} parent=23 // pred_check_branch
          %153 = sbr.rel (%p151) target = $region28
        $region27: #{tpu_custom_call.1} parent=23 // pred_region
          %s154 = sand.u32 %s26, 1
          %s155 = scalar_lea.sflag [#allocation3], %s154
          %s156 = sand.u32 %s26, 1
          %s157 = smul.addr %s156, 1200
          %s158 = scalar_lea.vmem [#allocation2], %s157
          %s159 = smul.u32 75, %s16
          %s161 = ssub.s32 19200, 19200
          %162 = vsyncadd %s155, %s161
          %s163 = smul.addr %s159, 2
          %s164 = smul.addr %s163, 128
          %s165 = scalar_lea.hbm %s0, %s164
          %s166 = sshll.u32 %s158, 4
          %s167 = int_to_ptr.vmem [resolvable:$true] %s166
          %172 = dma.hbm_to_vmem [thread:$0]  %s165, 19200, %s167, %s155, 256, 256, 16
        $region28: #{tpu_custom_call.1} parent=23 // pred_fallthru
          _
      $region24: #{tpu_custom_call.1} parent=5 // pred_fallthru
        _
      %p173 = scmp.le.s32.totalorder 1, %s16
      %p174 = scmp.lt.s32.totalorder %s16, 3
      %p175 = pnand %p173, %p174
      %p176 = pneg %p175
      // Predicated region
      $region29: #{tpu_custom_call.1} parent=5 // pred_check
        _
      $region30: #{tpu_custom_call.1} parent=5 // pred_check_branch
        %178 = sbr.rel (%p175) target = $region32
      $region31: #{tpu_custom_call.1} parent=5 // pred_region
        %s179 = ssub.s32 %s16, 1
        %s180 = sand.u32 %s29, 1
        %s181 = scalar_lea.sflag [#allocation3], %s180
        %s182 = sand.u32 %s29, 1
        %s183 = smul.addr %s182, 1200
        %s184 = scalar_lea.vmem [#allocation2], %s183
        // Predicated region
        $region33: #{tpu_custom_call.1} parent=31 // pred_check
          %p185 = pneg %p42
        $region34: #{tpu_custom_call.1} parent=31 // pred_check_branch
          %187 = sbr.rel (%p185) target = $region36
        $region35: #{tpu_custom_call.1} parent=31 // pred_region
          %188 = dma.done %s181, 19200
        $region36: #{tpu_custom_call.1} parent=31 // pred_fallthru
          _
        // Predicated region
        $region37: #{tpu_custom_call.1} parent=31 // pred_check
          %p189 = pneg %p63
        $region38: #{tpu_custom_call.1} parent=31 // pred_check_branch
          %191 = sbr.rel (%p189) target = $region40
        $region39: #{tpu_custom_call.1} parent=31 // pred_region
          %192 = dma.done [#allocation6], 32
        $region40: #{tpu_custom_call.1} parent=31 // pred_fallthru
          _
        // Predicated region
        $region41: #{tpu_custom_call.1} parent=31 // pred_check
          %p193 = pneg %p84
        $region42: #{tpu_custom_call.1} parent=31 // pred_check_branch
          %195 = sbr.rel (%p193) target = $region44
        $region43: #{tpu_custom_call.1} parent=31 // pred_region
          %196 = dma.done [#allocation6], 32
        $region44: #{tpu_custom_call.1} parent=31 // pred_fallthru
          _
        %s197 = sand.u32 %s29, 1
        %s198 = scalar_lea.sflag [#allocation3], %s197
        %s199 = sand.u32 %s29, 1
        %s200 = smul.addr %s199, 1200
        %s201 = scalar_lea.vmem [#allocation2], %s200
        %p202 = pneg %p42
        %p203 = pneg %p39
        %p204 = pneg %p63
        %p205 = pneg %p60
        %p206 = pneg %p84
        %p207 = pneg %p81
        %p208 = pneg %p110
        %p209 = pneg %p107
        %s210 = sand.u32 %s97, 1
        %s211 = scalar_lea.sflag [#allocation4], %s210
        %s212 = sand.u32 %s97, 1
        %s213 = smul.addr %s212, 1200
        %s214 = scalar_lea.vmem [#allocation8], %s213
        %s215 = smul.u32 75, %s21
        %s216 = smul.u32 75, %s21
        %v217 = vld [vmem:[%s184] sm:$0xff]
        %v218 = vld [vmem:[%s184 + $0x8] sm:$0xff]
        %v219 = vld [vmem:[%s184 + $0x10] sm:$0xff]
        %v220 = vld [vmem:[%s184 + $0x18] sm:$0xff]
        %v221 = vld [vmem:[%s184 + $0x20] sm:$0xff]
        %v222 = vld [vmem:[%s184 + $0x28] sm:$0xff]
        %v223 = vld [vmem:[%s184 + $0x30] sm:$0xff]
        %v224 = vld [vmem:[%s184 + $0x38] sm:$0xff]
        %v225 = vld [vmem:[%s184 + $0x40] sm:$0xff]
        %v226 = vld [vmem:[%s184 + $0x48] sm:$0xff]
        %v227 = vld [vmem:[%s184 + $0x50] sm:$0xff]
        %v228 = vld [vmem:[%s184 + $0x58] sm:$0xff]
        %v229 = vld [vmem:[%s184 + $0x60] sm:$0xff]
        %v230 = vld [vmem:[%s184 + $0x68] sm:$0xff]
        %v231 = vld [vmem:[%s184 + $0x70] sm:$0xff]
        %v232 = vld [vmem:[%s184 + $0x78] sm:$0xff]
        %v233 = vld [vmem:[%s184 + $0x80] sm:$0xff]
        %v234 = vld [vmem:[%s184 + $0x88] sm:$0xff]
        %v235 = vld [vmem:[%s184 + $0x90] sm:$0xff]
        %v236 = vld [vmem:[%s184 + $0x98] sm:$0xff]
        %v237 = vld [vmem:[%s184 + $0xa0] sm:$0xff]
        %v238 = vld [vmem:[%s184 + $0xa8] sm:$0xff]
        %v239 = vld [vmem:[%s184 + $0xb0] sm:$0xff]
        %v240 = vld [vmem:[%s184 + $0xb8] sm:$0xff]
        %v241 = vld [vmem:[%s184 + $0xc0] sm:$0xff]
        %v242 = vld [vmem:[%s184 + $0xc8] sm:$0xff]
        %v243 = vld [vmem:[%s184 + $0xd0] sm:$0xff]
        %v244 = vld [vmem:[%s184 + $0xd8] sm:$0xff]
        %v245 = vld [vmem:[%s184 + $0xe0] sm:$0xff]
        %v246 = vld [vmem:[%s184 + $0xe8] sm:$0xff]
        %v247 = vld [vmem:[%s184 + $0xf0] sm:$0xff]
        %v248 = vld [vmem:[%s184 + $0xf8] sm:$0xff]
        %v249 = vld [vmem:[%s184 + $0x100] sm:$0xff]
        %v250 = vld [vmem:[%s184 + $0x108] sm:$0xff]
        %v251 = vld [vmem:[%s184 + $0x110] sm:$0xff]
        %v252 = vld [vmem:[%s184 + $0x118] sm:$0xff]
        %v253 = vld [vmem:[%s184 + $0x120] sm:$0xff]
        %v254 = vld [vmem:[%s184 + $0x128] sm:$0xff]
        %v255 = vld [vmem:[%s184 + $0x130] sm:$0xff]
        %v256 = vld [vmem:[%s184 + $0x138] sm:$0xff]
        %v257 = vld [vmem:[%s184 + $0x140] sm:$0xff]
        %v258 = vld [vmem:[%s184 + $0x148] sm:$0xff]
        %v259 = vld [vmem:[%s184 + $0x150] sm:$0xff]
        %v260 = vld [vmem:[%s184 + $0x158] sm:$0xff]
        %v261 = vld [vmem:[%s184 + $0x160] sm:$0xff]
        %v262 = vld [vmem:[%s184 + $0x168] sm:$0xff]
        %v263 = vld [vmem:[%s184 + $0x170] sm:$0xff]
        %v264 = vld [vmem:[%s184 + $0x178] sm:$0xff]
        %v265 = vld [vmem:[%s184 + $0x180] sm:$0xff]
        %v266 = vld [vmem:[%s184 + $0x188] sm:$0xff]
        %v267 = vld [vmem:[%s184 + $0x190] sm:$0xff]
        %v268 = vld [vmem:[%s184 + $0x198] sm:$0xff]
        %v269 = vld [vmem:[%s184 + $0x1a0] sm:$0xff]
        %v270 = vld [vmem:[%s184 + $0x1a8] sm:$0xff]
        %v271 = vld [vmem:[%s184 + $0x1b0] sm:$0xff]
        %v272 = vld [vmem:[%s184 + $0x1b8] sm:$0xff]
        %v273 = vld [vmem:[%s184 + $0x1c0] sm:$0xff]
        %v274 = vld [vmem:[%s184 + $0x1c8] sm:$0xff]
        %v275 = vld [vmem:[%s184 + $0x1d0] sm:$0xff]
        %v276 = vld [vmem:[%s184 + $0x1d8] sm:$0xff]
        %v277 = vld [vmem:[%s184 + $0x1e0] sm:$0xff]
        %v278 = vld [vmem:[%s184 + $0x1e8] sm:$0xff]
        %v279 = vld [vmem:[%s184 + $0x1f0] sm:$0xff]
        %v280 = vld [vmem:[%s184 + $0x1f8] sm:$0xff]
        %v281 = vld [vmem:[%s184 + $0x200] sm:$0xff]
        %v282 = vld [vmem:[%s184 + $0x208] sm:$0xff]
        %v283 = vld [vmem:[%s184 + $0x210] sm:$0xff]
        %v284 = vld [vmem:[%s184 + $0x218] sm:$0xff]
        %v285 = vld [vmem:[%s184 + $0x220] sm:$0xff]
        %v286 = vld [vmem:[%s184 + $0x228] sm:$0xff]
        %v287 = vld [vmem:[%s184 + $0x230] sm:$0xff]
        %v288 = vld [vmem:[%s184 + $0x238] sm:$0xff]
        %v289 = vld [vmem:[%s184 + $0x240] sm:$0xff]
        %v290 = vld [vmem:[%s184 + $0x248] sm:$0xff]
        %v291 = vld [vmem:[%s184 + $0x250] sm:$0xff]
        %v292 = vld [vmem:[%s184 + $0x258] sm:$0xff]
        %v293 = vld [vmem:[%s184 + $0x260] sm:$0xff]
        %v294 = vld [vmem:[%s184 + $0x268] sm:$0xff]
        %v295 = vld [vmem:[%s184 + $0x270] sm:$0xff]
        %v296 = vld [vmem:[%s184 + $0x278] sm:$0xff]
        %v297 = vld [vmem:[%s184 + $0x280] sm:$0xff]
        %v298 = vld [vmem:[%s184 + $0x288] sm:$0xff]
        %v299 = vld [vmem:[%s184 + $0x290] sm:$0xff]
        %v300 = vld [vmem:[%s184 + $0x298] sm:$0xff]
        %v301 = vld [vmem:[%s184 + $0x2a0] sm:$0xff]
        %v302 = vld [vmem:[%s184 + $0x2a8] sm:$0xff]
        %v303 = vld [vmem:[%s184 + $0x2b0] sm:$0xff]
        %v304 = vld [vmem:[%s184 + $0x2b8] sm:$0xff]
        %v305 = vld [vmem:[%s184 + $0x2c0] sm:$0xff]
        %v306 = vld [vmem:[%s184 + $0x2c8] sm:$0xff]
        %v307 = vld [vmem:[%s184 + $0x2d0] sm:$0xff]
        %v308 = vld [vmem:[%s184 + $0x2d8] sm:$0xff]
        %v309 = vld [vmem:[%s184 + $0x2e0] sm:$0xff]
        %v310 = vld [vmem:[%s184 + $0x2e8] sm:$0xff]
        %v311 = vld [vmem:[%s184 + $0x2f0] sm:$0xff]
        %v312 = vld [vmem:[%s184 + $0x2f8] sm:$0xff]
        %v313 = vld [vmem:[%s184 + $0x300] sm:$0xff]
        %v314 = vld [vmem:[%s184 + $0x308] sm:$0xff]
        %v315 = vld [vmem:[%s184 + $0x310] sm:$0xff]
        %v316 = vld [vmem:[%s184 + $0x318] sm:$0xff]
        %v317 = vld [vmem:[%s184 + $0x320] sm:$0xff]
        %v318 = vld [vmem:[%s184 + $0x328] sm:$0xff]
        %v319 = vld [vmem:[%s184 + $0x330] sm:$0xff]
        %v320 = vld [vmem:[%s184 + $0x338] sm:$0xff]
        %v321 = vld [vmem:[%s184 + $0x340] sm:$0xff]
        %v322 = vld [vmem:[%s184 + $0x348] sm:$0xff]
        %v323 = vld [vmem:[%s184 + $0x350] sm:$0xff]
        %v324 = vld [vmem:[%s184 + $0x358] sm:$0xff]
        %v325 = vld [vmem:[%s184 + $0x360] sm:$0xff]
        %v326 = vld [vmem:[%s184 + $0x368] sm:$0xff]
        %v327 = vld [vmem:[%s184 + $0x370] sm:$0xff]
        %v328 = vld [vmem:[%s184 + $0x378] sm:$0xff]
        %v329 = vld [vmem:[%s184 + $0x380] sm:$0xff]
        %v330 = vld [vmem:[%s184 + $0x388] sm:$0xff]
        %v331 = vld [vmem:[%s184 + $0x390] sm:$0xff]
        %v332 = vld [vmem:[%s184 + $0x398] sm:$0xff]
        %v333 = vld [vmem:[%s184 + $0x3a0] sm:$0xff]
        %v334 = vld [vmem:[%s184 + $0x3a8] sm:$0xff]
        %v335 = vld [vmem:[%s184 + $0x3b0] sm:$0xff]
        %v336 = vld [vmem:[%s184 + $0x3b8] sm:$0xff]
        %v337 = vld [vmem:[%s184 + $0x3c0] sm:$0xff]
        %v338 = vld [vmem:[%s184 + $0x3c8] sm:$0xff]
        %v339 = vld [vmem:[%s184 + $0x3d0] sm:$0xff]
        %v340 = vld [vmem:[%s184 + $0x3d8] sm:$0xff]
        %v341 = vld [vmem:[%s184 + $0x3e0] sm:$0xff]
        %v342 = vld [vmem:[%s184 + $0x3e8] sm:$0xff]
        %v343 = vld [vmem:[%s184 + $0x3f0] sm:$0xff]
        %v344 = vld [vmem:[%s184 + $0x3f8] sm:$0xff]
        %v345 = vld [vmem:[%s184 + $0x400] sm:$0xff]
        %v346 = vld [vmem:[%s184 + $0x408] sm:$0xff]
        %v347 = vld [vmem:[%s184 + $0x410] sm:$0xff]
        %v348 = vld [vmem:[%s184 + $0x418] sm:$0xff]
        %v349 = vld [vmem:[%s184 + $0x420] sm:$0xff]
        %v350 = vld [vmem:[%s184 + $0x428] sm:$0xff]
        %v351 = vld [vmem:[%s184 + $0x430] sm:$0xff]
        %v352 = vld [vmem:[%s184 + $0x438] sm:$0xff]
        %v353 = vld [vmem:[%s184 + $0x440] sm:$0xff]
        %v354 = vld [vmem:[%s184 + $0x448] sm:$0xff]
        %v355 = vld [vmem:[%s184 + $0x450] sm:$0xff]
        %v356 = vld [vmem:[%s184 + $0x458] sm:$0xff]
        %v357 = vld [vmem:[%s184 + $0x460] sm:$0xff]
        %v358 = vld [vmem:[%s184 + $0x468] sm:$0xff]
        %v359 = vld [vmem:[%s184 + $0x470] sm:$0xff]
        %v360 = vld [vmem:[%s184 + $0x478] sm:$0xff]
        %v361 = vld [vmem:[%s184 + $0x480] sm:$0xff]
        %v362 = vld [vmem:[%s184 + $0x488] sm:$0xff]
        %v363 = vld [vmem:[%s184 + $0x490] sm:$0xff]
        %v364 = vld [vmem:[%s184 + $0x498] sm:$0xff]
        %v365 = vld [vmem:[%s184 + $0x4a0] sm:$0xff]
        %v366 = vld [vmem:[%s184 + $0x4a8] sm:$0xff]
        %v367 = vadd.f32 %v217, %v218
        %368 = vadd.xlane.f32.xlu0 %v367
        %v369 = vpop.xlane.xlu0 %368
        %v370 = vadd.f32 %v219, %v220
        %371 = vadd.xlane.f32.xlu0 %v370
        %v372 = vpop.xlane.xlu0 %371
        %v373 = vadd.f32 %v221, %v222
        %374 = vadd.xlane.f32.xlu0 %v373
        %v375 = vpop.xlane.xlu0 %374
        %v376 = vadd.f32 %v223, %v224
        %377 = vadd.xlane.f32.xlu0 %v376
        %v378 = vpop.xlane.xlu0 %377
        %v379 = vadd.f32 %v225, %v226
        %380 = vadd.xlane.f32.xlu0 %v379
        %v381 = vpop.xlane.xlu0 %380
        %v382 = vadd.f32 %v227, %v228
        %383 = vadd.xlane.f32.xlu0 %v382
        %v384 = vpop.xlane.xlu0 %383
        %v385 = vadd.f32 %v229, %v230
        %386 = vadd.xlane.f32.xlu0 %v385
        %v387 = vpop.xlane.xlu0 %386
        %v388 = vadd.f32 %v231, %v232
        %389 = vadd.xlane.f32.xlu0 %v388
        %v390 = vpop.xlane.xlu0 %389
        %v391 = vadd.f32 %v233, %v234
        %392 = vadd.xlane.f32.xlu0 %v391
        %v393 = vpop.xlane.xlu0 %392
        %v394 = vadd.f32 %v235, %v236
        %395 = vadd.xlane.f32.xlu0 %v394
        %v396 = vpop.xlane.xlu0 %395
        %v397 = vadd.f32 %v237, %v238
        %398 = vadd.xlane.f32.xlu0 %v397
        %v399 = vpop.xlane.xlu0 %398
        %v400 = vadd.f32 %v239, %v240
        %401 = vadd.xlane.f32.xlu0 %v400
        %v402 = vpop.xlane.xlu0 %401
        %v403 = vadd.f32 %v241, %v242
        %404 = vadd.xlane.f32.xlu0 %v403
        %v405 = vpop.xlane.xlu0 %404
        %v406 = vadd.f32 %v243, %v244
        %407 = vadd.xlane.f32.xlu0 %v406
        %v408 = vpop.xlane.xlu0 %407
        %v409 = vadd.f32 %v245, %v246
        %410 = vadd.xlane.f32.xlu0 %v409
        %v411 = vpop.xlane.xlu0 %410
        %v412 = vadd.f32 %v247, %v248
        %413 = vadd.xlane.f32.xlu0 %v412
        %v414 = vpop.xlane.xlu0 %413
        %v415 = vadd.f32 %v249, %v250
        %416 = vadd.xlane.f32.xlu0 %v415
        %v417 = vpop.xlane.xlu0 %416
        %v418 = vadd.f32 %v251, %v252
        %419 = vadd.xlane.f32.xlu0 %v418
        %v420 = vpop.xlane.xlu0 %419
        %v421 = vadd.f32 %v253, %v254
        %422 = vadd.xlane.f32.xlu0 %v421
        %v423 = vpop.xlane.xlu0 %422
        %v424 = vadd.f32 %v255, %v256
        %425 = vadd.xlane.f32.xlu0 %v424
        %v426 = vpop.xlane.xlu0 %425
        %v427 = vadd.f32 %v257, %v258
        %428 = vadd.xlane.f32.xlu0 %v427
        %v429 = vpop.xlane.xlu0 %428
        %v430 = vadd.f32 %v259, %v260
        %431 = vadd.xlane.f32.xlu0 %v430
        %v432 = vpop.xlane.xlu0 %431
        %v433 = vadd.f32 %v261, %v262
        %434 = vadd.xlane.f32.xlu0 %v433
        %v435 = vpop.xlane.xlu0 %434
        %v436 = vadd.f32 %v263, %v264
        %437 = vadd.xlane.f32.xlu0 %v436
        %v438 = vpop.xlane.xlu0 %437
        %v439 = vadd.f32 %v265, %v266
        %440 = vadd.xlane.f32.xlu0 %v439
        %v441 = vpop.xlane.xlu0 %440
        %v442 = vadd.f32 %v267, %v268
        %443 = vadd.xlane.f32.xlu0 %v442
        %v444 = vpop.xlane.xlu0 %443
        %v445 = vadd.f32 %v269, %v270
        %446 = vadd.xlane.f32.xlu0 %v445
        %v447 = vpop.xlane.xlu0 %446
        %v448 = vadd.f32 %v271, %v272
        %449 = vadd.xlane.f32.xlu0 %v448
        %v450 = vpop.xlane.xlu0 %449
        %v451 = vadd.f32 %v273, %v274
        %452 = vadd.xlane.f32.xlu0 %v451
        %v453 = vpop.xlane.xlu0 %452
        %v454 = vadd.f32 %v275, %v276
        %455 = vadd.xlane.f32.xlu0 %v454
        %v456 = vpop.xlane.xlu0 %455
        %v457 = vadd.f32 %v277, %v278
        %458 = vadd.xlane.f32.xlu0 %v457
        %v459 = vpop.xlane.xlu0 %458
        %v460 = vadd.f32 %v279, %v280
        %461 = vadd.xlane.f32.xlu0 %v460
        %v462 = vpop.xlane.xlu0 %461
        %v463 = vadd.f32 %v281, %v282
        %464 = vadd.xlane.f32.xlu0 %v463
        %v465 = vpop.xlane.xlu0 %464
        %v466 = vadd.f32 %v283, %v284
        %467 = vadd.xlane.f32.xlu0 %v466
        %v468 = vpop.xlane.xlu0 %467
        %v469 = vadd.f32 %v285, %v286
        %470 = vadd.xlane.f32.xlu0 %v469
        %v471 = vpop.xlane.xlu0 %470
        %v472 = vadd.f32 %v287, %v288
        %473 = vadd.xlane.f32.xlu0 %v472
        %v474 = vpop.xlane.xlu0 %473
        %v475 = vadd.f32 %v289, %v290
        %476 = vadd.xlane.f32.xlu0 %v475
        %v477 = vpop.xlane.xlu0 %476
        %v478 = vadd.f32 %v291, %v292
        %479 = vadd.xlane.f32.xlu0 %v478
        %v480 = vpop.xlane.xlu0 %479
        %v481 = vadd.f32 %v293, %v294
        %482 = vadd.xlane.f32.xlu0 %v481
        %v483 = vpop.xlane.xlu0 %482
        %v484 = vadd.f32 %v295, %v296
        %485 = vadd.xlane.f32.xlu0 %v484
        %v486 = vpop.xlane.xlu0 %485
        %v487 = vadd.f32 %v297, %v298
        %488 = vadd.xlane.f32.xlu0 %v487
        %v489 = vpop.xlane.xlu0 %488
        %v490 = vadd.f32 %v299, %v300
        %491 = vadd.xlane.f32.xlu0 %v490
        %v492 = vpop.xlane.xlu0 %491
        %v493 = vadd.f32 %v301, %v302
        %494 = vadd.xlane.f32.xlu0 %v493
        %v495 = vpop.xlane.xlu0 %494
        %v496 = vadd.f32 %v303, %v304
        %497 = vadd.xlane.f32.xlu0 %v496
        %v498 = vpop.xlane.xlu0 %497
        %v499 = vadd.f32 %v305, %v306
        %500 = vadd.xlane.f32.xlu0 %v499
        %v501 = vpop.xlane.xlu0 %500
        %v502 = vadd.f32 %v307, %v308
        %503 = vadd.xlane.f32.xlu0 %v502
        %v504 = vpop.xlane.xlu0 %503
        %v505 = vadd.f32 %v309, %v310
        %506 = vadd.xlane.f32.xlu0 %v505
        %v507 = vpop.xlane.xlu0 %506
        %v508 = vadd.f32 %v311, %v312
        %509 = vadd.xlane.f32.xlu0 %v508
        %v510 = vpop.xlane.xlu0 %509
        %v511 = vadd.f32 %v313, %v314
        %512 = vadd.xlane.f32.xlu0 %v511
        %v513 = vpop.xlane.xlu0 %512
        %v514 = vadd.f32 %v315, %v316
        %515 = vadd.xlane.f32.xlu0 %v514
        %v516 = vpop.xlane.xlu0 %515
        %v517 = vadd.f32 %v317, %v318
        %518 = vadd.xlane.f32.xlu0 %v517
        %v519 = vpop.xlane.xlu0 %518
        %v520 = vadd.f32 %v319, %v320
        %521 = vadd.xlane.f32.xlu0 %v520
        %v522 = vpop.xlane.xlu0 %521
        %v523 = vadd.f32 %v321, %v322
        %524 = vadd.xlane.f32.xlu0 %v523
        %v525 = vpop.xlane.xlu0 %524
        %v526 = vadd.f32 %v323, %v324
        %527 = vadd.xlane.f32.xlu0 %v526
        %v528 = vpop.xlane.xlu0 %527
        %v529 = vadd.f32 %v325, %v326
        %530 = vadd.xlane.f32.xlu0 %v529
        %v531 = vpop.xlane.xlu0 %530
        %v532 = vadd.f32 %v327, %v328
        %533 = vadd.xlane.f32.xlu0 %v532
        %v534 = vpop.xlane.xlu0 %533
        %v535 = vadd.f32 %v329, %v330
        %536 = vadd.xlane.f32.xlu0 %v535
        %v537 = vpop.xlane.xlu0 %536
        %v538 = vadd.f32 %v331, %v332
        %539 = vadd.xlane.f32.xlu0 %v538
        %v540 = vpop.xlane.xlu0 %539
        %v541 = vadd.f32 %v333, %v334
        %542 = vadd.xlane.f32.xlu0 %v541
        %v543 = vpop.xlane.xlu0 %542
        %v544 = vadd.f32 %v335, %v336
        %545 = vadd.xlane.f32.xlu0 %v544
        %v546 = vpop.xlane.xlu0 %545
        %v547 = vadd.f32 %v337, %v338
        %548 = vadd.xlane.f32.xlu0 %v547
        %v549 = vpop.xlane.xlu0 %548
        %v550 = vadd.f32 %v339, %v340
        %551 = vadd.xlane.f32.xlu0 %v550
        %v552 = vpop.xlane.xlu0 %551
        %v553 = vadd.f32 %v341, %v342
        %554 = vadd.xlane.f32.xlu0 %v553
        %v555 = vpop.xlane.xlu0 %554
        %v556 = vadd.f32 %v343, %v344
        %557 = vadd.xlane.f32.xlu0 %v556
        %v558 = vpop.xlane.xlu0 %557
        %v559 = vadd.f32 %v345, %v346
        %560 = vadd.xlane.f32.xlu0 %v559
        %v561 = vpop.xlane.xlu0 %560
        %v562 = vadd.f32 %v347, %v348
        %563 = vadd.xlane.f32.xlu0 %v562
        %v564 = vpop.xlane.xlu0 %563
        %v565 = vadd.f32 %v349, %v350
        %566 = vadd.xlane.f32.xlu0 %v565
        %v567 = vpop.xlane.xlu0 %566
        %v568 = vadd.f32 %v351, %v352
        %569 = vadd.xlane.f32.xlu0 %v568
        %v570 = vpop.xlane.xlu0 %569
        %v571 = vadd.f32 %v353, %v354
        %572 = vadd.xlane.f32.xlu0 %v571
        %v573 = vpop.xlane.xlu0 %572
        %v574 = vadd.f32 %v355, %v356
        %575 = vadd.xlane.f32.xlu0 %v574
        %v576 = vpop.xlane.xlu0 %575
        %v577 = vadd.f32 %v357, %v358
        %578 = vadd.xlane.f32.xlu0 %v577
        %v579 = vpop.xlane.xlu0 %578
        %v580 = vadd.f32 %v359, %v360
        %581 = vadd.xlane.f32.xlu0 %v580
        %v582 = vpop.xlane.xlu0 %581
        %v583 = vadd.f32 %v361, %v362
        %584 = vadd.xlane.f32.xlu0 %v583
        %v585 = vpop.xlane.xlu0 %584
        %v586 = vadd.f32 %v363, %v364
        %587 = vadd.xlane.f32.xlu0 %v586
        %v588 = vpop.xlane.xlu0 %587
        %v589 = vadd.f32 %v365, %v366
        %590 = vadd.xlane.f32.xlu0 %v589
        %v591 = vpop.xlane.xlu0 %590
        %v592 = vrcp.pop 256.0
        %v593 = vmul.f32 %v369, %v592
        %v594 = vmul.f32 %v372, %v592
        %v595 = vmul.f32 %v375, %v592
        %v596 = vmul.f32 %v378, %v592
        %v597 = vmul.f32 %v381, %v592
        %v598 = vmul.f32 %v384, %v592
        %v599 = vmul.f32 %v387, %v592
        %v600 = vmul.f32 %v390, %v592
        %v601 = vmul.f32 %v393, %v592
        %v602 = vmul.f32 %v396, %v592
        %v603 = vmul.f32 %v399, %v592
        %v604 = vmul.f32 %v402, %v592
        %v605 = vmul.f32 %v405, %v592
        %v606 = vmul.f32 %v408, %v592
        %v607 = vmul.f32 %v411, %v592
        %v608 = vmul.f32 %v414, %v592
        %v609 = vmul.f32 %v417, %v592
        %v610 = vmul.f32 %v420, %v592
        %v611 = vmul.f32 %v423, %v592
        %v612 = vmul.f32 %v426, %v592
        %v613 = vmul.f32 %v429, %v592
        %v614 = vmul.f32 %v432, %v592
        %v615 = vmul.f32 %v435, %v592
        %v616 = vmul.f32 %v438, %v592
        %v617 = vmul.f32 %v441, %v592
        %v618 = vmul.f32 %v444, %v592
        %v619 = vmul.f32 %v447, %v592
        %v620 = vmul.f32 %v450, %v592
        %v621 = vmul.f32 %v453, %v592
        %v622 = vmul.f32 %v456, %v592
        %v623 = vmul.f32 %v459, %v592
        %v624 = vmul.f32 %v462, %v592
        %v625 = vmul.f32 %v465, %v592
        %v626 = vmul.f32 %v468, %v592
        %v627 = vmul.f32 %v471, %v592
        %v628 = vmul.f32 %v474, %v592
        %v629 = vmul.f32 %v477, %v592
        %v630 = vmul.f32 %v480, %v592
        %v631 = vmul.f32 %v483, %v592
        %v632 = vmul.f32 %v486, %v592
        %v633 = vmul.f32 %v489, %v592
        %v634 = vmul.f32 %v492, %v592
        %v635 = vmul.f32 %v495, %v592
        %v636 = vmul.f32 %v498, %v592
        %v637 = vmul.f32 %v501, %v592
        %v638 = vmul.f32 %v504, %v592
        %v639 = vmul.f32 %v507, %v592
        %v640 = vmul.f32 %v510, %v592
        %v641 = vmul.f32 %v513, %v592
        %v642 = vmul.f32 %v516, %v592
        %v643 = vmul.f32 %v519, %v592
        %v644 = vmul.f32 %v522, %v592
        %v645 = vmul.f32 %v525, %v592
        %v646 = vmul.f32 %v528, %v592
        %v647 = vmul.f32 %v531, %v592
        %v648 = vmul.f32 %v534, %v592
        %v649 = vmul.f32 %v537, %v592
        %v650 = vmul.f32 %v540, %v592
        %v651 = vmul.f32 %v543, %v592
        %v652 = vmul.f32 %v546, %v592
        %v653 = vmul.f32 %v549, %v592
        %v654 = vmul.f32 %v552, %v592
        %v655 = vmul.f32 %v555, %v592
        %v656 = vmul.f32 %v558, %v592
        %v657 = vmul.f32 %v561, %v592
        %v658 = vmul.f32 %v564, %v592
        %v659 = vmul.f32 %v567, %v592
        %v660 = vmul.f32 %v570, %v592
        %v661 = vmul.f32 %v573, %v592
        %v662 = vmul.f32 %v576, %v592
        %v663 = vmul.f32 %v579, %v592
        %v664 = vmul.f32 %v582, %v592
        %v665 = vmul.f32 %v585, %v592
        %v666 = vmul.f32 %v588, %v592
        %v667 = vmul.f32 %v591, %v592
        %v668 = vsub.f32 %v217, %v593
        %v669 = vsub.f32 %v218, %v593
        %v670 = vsub.f32 %v219, %v594
        %v671 = vsub.f32 %v220, %v594
        %v672 = vsub.f32 %v221, %v595
        %v673 = vsub.f32 %v222, %v595
        %v674 = vsub.f32 %v223, %v596
        %v675 = vsub.f32 %v224, %v596
        %v676 = vsub.f32 %v225, %v597
        %v677 = vsub.f32 %v226, %v597
        %v678 = vsub.f32 %v227, %v598
        %v679 = vsub.f32 %v228, %v598
        %v680 = vsub.f32 %v229, %v599
        %v681 = vsub.f32 %v230, %v599
        %v682 = vsub.f32 %v231, %v600
        %v683 = vsub.f32 %v232, %v600
        %v684 = vsub.f32 %v233, %v601
        %v685 = vsub.f32 %v234, %v601
        %v686 = vsub.f32 %v235, %v602
        %v687 = vsub.f32 %v236, %v602
        %v688 = vsub.f32 %v237, %v603
        %v689 = vsub.f32 %v238, %v603
        %v690 = vsub.f32 %v239, %v604
        %v691 = vsub.f32 %v240, %v604
        %v692 = vsub.f32 %v241, %v605
        %v693 = vsub.f32 %v242, %v605
        %v694 = vsub.f32 %v243, %v606
        %v695 = vsub.f32 %v244, %v606
        %v696 = vsub.f32 %v245, %v607
        %v697 = vsub.f32 %v246, %v607
        %v698 = vsub.f32 %v247, %v608
        %v699 = vsub.f32 %v248, %v608
        %v700 = vsub.f32 %v249, %v609
        %v701 = vsub.f32 %v250, %v609
        %v702 = vsub.f32 %v251, %v610
        %v703 = vsub.f32 %v252, %v610
        %v704 = vsub.f32 %v253, %v611
        %v705 = vsub.f32 %v254, %v611
        %v706 = vsub.f32 %v255, %v612
        %v707 = vsub.f32 %v256, %v612
        %v708 = vsub.f32 %v257, %v613
        %v709 = vsub.f32 %v258, %v613
        %v710 = vsub.f32 %v259, %v614
        %v711 = vsub.f32 %v260, %v614
        %v712 = vsub.f32 %v261, %v615
        %v713 = vsub.f32 %v262, %v615
        %v714 = vsub.f32 %v263, %v616
        %v715 = vsub.f32 %v264, %v616
        %v716 = vsub.f32 %v265, %v617
        %v717 = vsub.f32 %v266, %v617
        %v718 = vsub.f32 %v267, %v618
        %v719 = vsub.f32 %v268, %v618
        %v720 = vsub.f32 %v269, %v619
        %v721 = vsub.f32 %v270, %v619
        %v722 = vsub.f32 %v271, %v620
        %v723 = vsub.f32 %v272, %v620
        %v724 = vsub.f32 %v273, %v621
        %v725 = vsub.f32 %v274, %v621
        %v726 = vsub.f32 %v275, %v622
        %v727 = vsub.f32 %v276, %v622
        %v728 = vsub.f32 %v277, %v623
        %v729 = vsub.f32 %v278, %v623
        %v730 = vsub.f32 %v279, %v624
        %v731 = vsub.f32 %v280, %v624
        %v732 = vsub.f32 %v281, %v625
        %v733 = vsub.f32 %v282, %v625
        %v734 = vsub.f32 %v283, %v626
        %v735 = vsub.f32 %v284, %v626
        %v736 = vsub.f32 %v285, %v627
        %v737 = vsub.f32 %v286, %v627
        %v738 = vsub.f32 %v287, %v628
        %v739 = vsub.f32 %v288, %v628
        %v740 = vsub.f32 %v289, %v629
        %v741 = vsub.f32 %v290, %v629
        %v742 = vsub.f32 %v291, %v630
        %v743 = vsub.f32 %v292, %v630
        %v744 = vsub.f32 %v293, %v631
        %v745 = vsub.f32 %v294, %v631
        %v746 = vsub.f32 %v295, %v632
        %v747 = vsub.f32 %v296, %v632
        %v748 = vsub.f32 %v297, %v633
        %v749 = vsub.f32 %v298, %v633
        %v750 = vsub.f32 %v299, %v634
        %v751 = vsub.f32 %v300, %v634
        %v752 = vsub.f32 %v301, %v635
        %v753 = vsub.f32 %v302, %v635
        %v754 = vsub.f32 %v303, %v636
        %v755 = vsub.f32 %v304, %v636
        %v756 = vsub.f32 %v305, %v637
        %v757 = vsub.f32 %v306, %v637
        %v758 = vsub.f32 %v307, %v638
        %v759 = vsub.f32 %v308, %v638
        %v760 = vsub.f32 %v309, %v639
        %v761 = vsub.f32 %v310, %v639
        %v762 = vsub.f32 %v311, %v640
        %v763 = vsub.f32 %v312, %v640
        %v764 = vsub.f32 %v313, %v641
        %v765 = vsub.f32 %v314, %v641
        %v766 = vsub.f32 %v315, %v642
        %v767 = vsub.f32 %v316, %v642
        %v768 = vsub.f32 %v317, %v643
        %v769 = vsub.f32 %v318, %v643
        %v770 = vsub.f32 %v319, %v644
        %v771 = vsub.f32 %v320, %v644
        %v772 = vsub.f32 %v321, %v645
        %v773 = vsub.f32 %v322, %v645
        %v774 = vsub.f32 %v323, %v646
        %v775 = vsub.f32 %v324, %v646
        %v776 = vsub.f32 %v325, %v647
        %v777 = vsub.f32 %v326, %v647
        %v778 = vsub.f32 %v327, %v648
        %v779 = vsub.f32 %v328, %v648
        %v780 = vsub.f32 %v329, %v649
        %v781 = vsub.f32 %v330, %v649
        %v782 = vsub.f32 %v331, %v650
        %v783 = vsub.f32 %v332, %v650
        %v784 = vsub.f32 %v333, %v651
        %v785 = vsub.f32 %v334, %v651
        %v786 = vsub.f32 %v335, %v652
        %v787 = vsub.f32 %v336, %v652
        %v788 = vsub.f32 %v337, %v653
        %v789 = vsub.f32 %v338, %v653
        %v790 = vsub.f32 %v339, %v654
        %v791 = vsub.f32 %v340, %v654
        %v792 = vsub.f32 %v341, %v655
        %v793 = vsub.f32 %v342, %v655
        %v794 = vsub.f32 %v343, %v656
        %v795 = vsub.f32 %v344, %v656
        %v796 = vsub.f32 %v345, %v657
        %v797 = vsub.f32 %v346, %v657
        %v798 = vsub.f32 %v347, %v658
        %v799 = vsub.f32 %v348, %v658
        %v800 = vsub.f32 %v349, %v659
        %v801 = vsub.f32 %v350, %v659
        %v802 = vsub.f32 %v351, %v660
        %v803 = vsub.f32 %v352, %v660
        %v804 = vsub.f32 %v353, %v661
        %v805 = vsub.f32 %v354, %v661
        %v806 = vsub.f32 %v355, %v662
        %v807 = vsub.f32 %v356, %v662
        %v808 = vsub.f32 %v357, %v663
        %v809 = vsub.f32 %v358, %v663
        %v810 = vsub.f32 %v359, %v664
        %v811 = vsub.f32 %v360, %v664
        %v812 = vsub.f32 %v361, %v665
        %v813 = vsub.f32 %v362, %v665
        %v814 = vsub.f32 %v363, %v666
        %v815 = vsub.f32 %v364, %v666
        %v816 = vsub.f32 %v365, %v667
        %v817 = vsub.f32 %v366, %v667
        %v818 = vmul.f32 %v668, %v668
        %v819 = vmul.f32 %v669, %v669
        %v820 = vmul.f32 %v670, %v670
        %v821 = vmul.f32 %v671, %v671
        %v822 = vmul.f32 %v672, %v672
        %v823 = vmul.f32 %v673, %v673
        %v824 = vmul.f32 %v674, %v674
        %v825 = vmul.f32 %v675, %v675
        %v826 = vmul.f32 %v676, %v676
        %v827 = vmul.f32 %v677, %v677
        %v828 = vmul.f32 %v678, %v678
        %v829 = vmul.f32 %v679, %v679
        %v830 = vmul.f32 %v680, %v680
        %v831 = vmul.f32 %v681, %v681
        %v832 = vmul.f32 %v682, %v682
        %v833 = vmul.f32 %v683, %v683
        %v834 = vmul.f32 %v684, %v684
        %v835 = vmul.f32 %v685, %v685
        %v836 = vmul.f32 %v686, %v686
        %v837 = vmul.f32 %v687, %v687
        %v838 = vmul.f32 %v688, %v688
        %v839 = vmul.f32 %v689, %v689
        %v840 = vmul.f32 %v690, %v690
        %v841 = vmul.f32 %v691, %v691
        %v842 = vmul.f32 %v692, %v692
        %v843 = vmul.f32 %v693, %v693
        %v844 = vmul.f32 %v694, %v694
        %v845 = vmul.f32 %v695, %v695
        %v846 = vmul.f32 %v696, %v696
        %v847 = vmul.f32 %v697, %v697
        %v848 = vmul.f32 %v698, %v698
        %v849 = vmul.f32 %v699, %v699
        %v850 = vmul.f32 %v700, %v700
        %v851 = vmul.f32 %v701, %v701
        %v852 = vmul.f32 %v702, %v702
        %v853 = vmul.f32 %v703, %v703
        %v854 = vmul.f32 %v704, %v704
        %v855 = vmul.f32 %v705, %v705
        %v856 = vmul.f32 %v706, %v706
        %v857 = vmul.f32 %v707, %v707
        %v858 = vmul.f32 %v708, %v708
        %v859 = vmul.f32 %v709, %v709
        %v860 = vmul.f32 %v710, %v710
        %v861 = vmul.f32 %v711, %v711
        %v862 = vmul.f32 %v712, %v712
        %v863 = vmul.f32 %v713, %v713
        %v864 = vmul.f32 %v714, %v714
        %v865 = vmul.f32 %v715, %v715
        %v866 = vmul.f32 %v716, %v716
        %v867 = vmul.f32 %v717, %v717
        %v868 = vmul.f32 %v718, %v718
        %v869 = vmul.f32 %v719, %v719
        %v870 = vmul.f32 %v720, %v720
        %v871 = vmul.f32 %v721, %v721
        %v872 = vmul.f32 %v722, %v722
        %v873 = vmul.f32 %v723, %v723
        %v874 = vmul.f32 %v724, %v724
        %v875 = vmul.f32 %v725, %v725
        %v876 = vmul.f32 %v726, %v726
        %v877 = vmul.f32 %v727, %v727
        %v878 = vmul.f32 %v728, %v728
        %v879 = vmul.f32 %v729, %v729
        %v880 = vmul.f32 %v730, %v730
        %v881 = vmul.f32 %v731, %v731
        %v882 = vmul.f32 %v732, %v732
        %v883 = vmul.f32 %v733, %v733
        %v884 = vmul.f32 %v734, %v734
        %v885 = vmul.f32 %v735, %v735
        %v886 = vmul.f32 %v736, %v736
        %v887 = vmul.f32 %v737, %v737
        %v888 = vmul.f32 %v738, %v738
        %v889 = vmul.f32 %v739, %v739
        %v890 = vmul.f32 %v740, %v740
        %v891 = vmul.f32 %v741, %v741
        %v892 = vmul.f32 %v742, %v742
        %v893 = vmul.f32 %v743, %v743
        %v894 = vmul.f32 %v744, %v744
        %v895 = vmul.f32 %v745, %v745
        %v896 = vmul.f32 %v746, %v746
        %v897 = vmul.f32 %v747, %v747
        %v898 = vmul.f32 %v748, %v748
        %v899 = vmul.f32 %v749, %v749
        %v900 = vmul.f32 %v750, %v750
        %v901 = vmul.f32 %v751, %v751
        %v902 = vmul.f32 %v752, %v752
        %v903 = vmul.f32 %v753, %v753
        %v904 = vmul.f32 %v754, %v754
        %v905 = vmul.f32 %v755, %v755
        %v906 = vmul.f32 %v756, %v756
        %v907 = vmul.f32 %v757, %v757
        %v908 = vmul.f32 %v758, %v758
        %v909 = vmul.f32 %v759, %v759
        %v910 = vmul.f32 %v760, %v760
        %v911 = vmul.f32 %v761, %v761
        %v912 = vmul.f32 %v762, %v762
        %v913 = vmul.f32 %v763, %v763
        %v914 = vmul.f32 %v764, %v764
        %v915 = vmul.f32 %v765, %v765
        %v916 = vmul.f32 %v766, %v766
        %v917 = vmul.f32 %v767, %v767
        %v918 = vmul.f32 %v768, %v768
        %v919 = vmul.f32 %v769, %v769
        %v920 = vmul.f32 %v770, %v770
        %v921 = vmul.f32 %v771, %v771
        %v922 = vmul.f32 %v772, %v772
        %v923 = vmul.f32 %v773, %v773
        %v924 = vmul.f32 %v774, %v774
        %v925 = vmul.f32 %v775, %v775
        %v926 = vmul.f32 %v776, %v776
        %v927 = vmul.f32 %v777, %v777
        %v928 = vmul.f32 %v778, %v778
        %v929 = vmul.f32 %v779, %v779
        %v930 = vmul.f32 %v780, %v780
        %v931 = vmul.f32 %v781, %v781
        %v932 = vmul.f32 %v782, %v782
        %v933 = vmul.f32 %v783, %v783
        %v934 = vmul.f32 %v784, %v784
        %v935 = vmul.f32 %v785, %v785
        %v936 = vmul.f32 %v786, %v786
        %v937 = vmul.f32 %v787, %v787
        %v938 = vmul.f32 %v788, %v788
        %v939 = vmul.f32 %v789, %v789
        %v940 = vmul.f32 %v790, %v790
        %v941 = vmul.f32 %v791, %v791
        %v942 = vmul.f32 %v792, %v792
        %v943 = vmul.f32 %v793, %v793
        %v944 = vmul.f32 %v794, %v794
        %v945 = vmul.f32 %v795, %v795
        %v946 = vmul.f32 %v796, %v796
        %v947 = vmul.f32 %v797, %v797
        %v948 = vmul.f32 %v798, %v798
        %v949 = vmul.f32 %v799, %v799
        %v950 = vmul.f32 %v800, %v800
        %v951 = vmul.f32 %v801, %v801
        %v952 = vmul.f32 %v802, %v802
        %v953 = vmul.f32 %v803, %v803
        %v954 = vmul.f32 %v804, %v804
        %v955 = vmul.f32 %v805, %v805
        %v956 = vmul.f32 %v806, %v806
        %v957 = vmul.f32 %v807, %v807
        %v958 = vmul.f32 %v808, %v808
        %v959 = vmul.f32 %v809, %v809
        %v960 = vmul.f32 %v810, %v810
        %v961 = vmul.f32 %v811, %v811
        %v962 = vmul.f32 %v812, %v812
        %v963 = vmul.f32 %v813, %v813
        %v964 = vmul.f32 %v814, %v814
        %v965 = vmul.f32 %v815, %v815
        %v966 = vmul.f32 %v816, %v816
        %v967 = vmul.f32 %v817, %v817
        %v968 = vadd.f32 %v818, %v819
        %969 = vadd.xlane.f32.xlu0 %v968
        %v970 = vpop.xlane.xlu0 %969
        %v971 = vadd.f32 %v820, %v821
        %972 = vadd.xlane.f32.xlu0 %v971
        %v973 = vpop.xlane.xlu0 %972
        %v974 = vadd.f32 %v822, %v823
        %975 = vadd.xlane.f32.xlu0 %v974
        %v976 = vpop.xlane.xlu0 %975
        %v977 = vadd.f32 %v824, %v825
        %978 = vadd.xlane.f32.xlu0 %v977
        %v979 = vpop.xlane.xlu0 %978
        %v980 = vadd.f32 %v826, %v827
        %981 = vadd.xlane.f32.xlu0 %v980
        %v982 = vpop.xlane.xlu0 %981
        %v983 = vadd.f32 %v828, %v829
        %984 = vadd.xlane.f32.xlu0 %v983
        %v985 = vpop.xlane.xlu0 %984
        %v986 = vadd.f32 %v830, %v831
        %987 = vadd.xlane.f32.xlu0 %v986
        %v988 = vpop.xlane.xlu0 %987
        %v989 = vadd.f32 %v832, %v833
        %990 = vadd.xlane.f32.xlu0 %v989
        %v991 = vpop.xlane.xlu0 %990
        %v992 = vadd.f32 %v834, %v835
        %993 = vadd.xlane.f32.xlu0 %v992
        %v994 = vpop.xlane.xlu0 %993
        %v995 = vadd.f32 %v836, %v837
        %996 = vadd.xlane.f32.xlu0 %v995
        %v997 = vpop.xlane.xlu0 %996
        %v998 = vadd.f32 %v838, %v839
        %999 = vadd.xlane.f32.xlu0 %v998
        %v1000 = vpop.xlane.xlu0 %999
        %v1001 = vadd.f32 %v840, %v841
        %1002 = vadd.xlane.f32.xlu0 %v1001
        %v1003 = vpop.xlane.xlu0 %1002
        %v1004 = vadd.f32 %v842, %v843
        %1005 = vadd.xlane.f32.xlu0 %v1004
        %v1006 = vpop.xlane.xlu0 %1005
        %v1007 = vadd.f32 %v844, %v845
        %1008 = vadd.xlane.f32.xlu0 %v1007
        %v1009 = vpop.xlane.xlu0 %1008
        %v1010 = vadd.f32 %v846, %v847
        %1011 = vadd.xlane.f32.xlu0 %v1010
        %v1012 = vpop.xlane.xlu0 %1011
        %v1013 = vadd.f32 %v848, %v849
        %1014 = vadd.xlane.f32.xlu0 %v1013
        %v1015 = vpop.xlane.xlu0 %1014
        %v1016 = vadd.f32 %v850, %v851
        %1017 = vadd.xlane.f32.xlu0 %v1016
        %v1018 = vpop.xlane.xlu0 %1017
        %v1019 = vadd.f32 %v852, %v853
        %1020 = vadd.xlane.f32.xlu0 %v1019
        %v1021 = vpop.xlane.xlu0 %1020
        %v1022 = vadd.f32 %v854, %v855
        %1023 = vadd.xlane.f32.xlu0 %v1022
        %v1024 = vpop.xlane.xlu0 %1023
        %v1025 = vadd.f32 %v856, %v857
        %1026 = vadd.xlane.f32.xlu0 %v1025
        %v1027 = vpop.xlane.xlu0 %1026
        %v1028 = vadd.f32 %v858, %v859
        %1029 = vadd.xlane.f32.xlu0 %v1028
        %v1030 = vpop.xlane.xlu0 %1029
        %v1031 = vadd.f32 %v860, %v861
        %1032 = vadd.xlane.f32.xlu0 %v1031
        %v1033 = vpop.xlane.xlu0 %1032
        %v1034 = vadd.f32 %v862, %v863
        %1035 = vadd.xlane.f32.xlu0 %v1034
        %v1036 = vpop.xlane.xlu0 %1035
        %v1037 = vadd.f32 %v864, %v865
        %1038 = vadd.xlane.f32.xlu0 %v1037
        %v1039 = vpop.xlane.xlu0 %1038
        %v1040 = vadd.f32 %v866, %v867
        %1041 = vadd.xlane.f32.xlu0 %v1040
        %v1042 = vpop.xlane.xlu0 %1041
        %v1043 = vadd.f32 %v868, %v869
        %1044 = vadd.xlane.f32.xlu0 %v1043
        %v1045 = vpop.xlane.xlu0 %1044
        %v1046 = vadd.f32 %v870, %v871
        %1047 = vadd.xlane.f32.xlu0 %v1046
        %v1048 = vpop.xlane.xlu0 %1047
        %v1049 = vadd.f32 %v872, %v873
        %1050 = vadd.xlane.f32.xlu0 %v1049
        %v1051 = vpop.xlane.xlu0 %1050
        %v1052 = vadd.f32 %v874, %v875
        %1053 = vadd.xlane.f32.xlu0 %v1052
        %v1054 = vpop.xlane.xlu0 %1053
        %v1055 = vadd.f32 %v876, %v877
        %1056 = vadd.xlane.f32.xlu0 %v1055
        %v1057 = vpop.xlane.xlu0 %1056
        %v1058 = vadd.f32 %v878, %v879
        %1059 = vadd.xlane.f32.xlu0 %v1058
        %v1060 = vpop.xlane.xlu0 %1059
        %v1061 = vadd.f32 %v880, %v881
        %1062 = vadd.xlane.f32.xlu0 %v1061
        %v1063 = vpop.xlane.xlu0 %1062
        %v1064 = vadd.f32 %v882, %v883
        %1065 = vadd.xlane.f32.xlu0 %v1064
        %v1066 = vpop.xlane.xlu0 %1065
        %v1067 = vadd.f32 %v884, %v885
        %1068 = vadd.xlane.f32.xlu0 %v1067
        %v1069 = vpop.xlane.xlu0 %1068
        %v1070 = vadd.f32 %v886, %v887
        %1071 = vadd.xlane.f32.xlu0 %v1070
        %v1072 = vpop.xlane.xlu0 %1071
        %v1073 = vadd.f32 %v888, %v889
        %1074 = vadd.xlane.f32.xlu0 %v1073
        %v1075 = vpop.xlane.xlu0 %1074
        %v1076 = vadd.f32 %v890, %v891
        %1077 = vadd.xlane.f32.xlu0 %v1076
        %v1078 = vpop.xlane.xlu0 %1077
        %v1079 = vadd.f32 %v892, %v893
        %1080 = vadd.xlane.f32.xlu0 %v1079
        %v1081 = vpop.xlane.xlu0 %1080
        %v1082 = vadd.f32 %v894, %v895
        %1083 = vadd.xlane.f32.xlu0 %v1082
        %v1084 = vpop.xlane.xlu0 %1083
        %v1085 = vadd.f32 %v896, %v897
        %1086 = vadd.xlane.f32.xlu0 %v1085
        %v1087 = vpop.xlane.xlu0 %1086
        %v1088 = vadd.f32 %v898, %v899
        %1089 = vadd.xlane.f32.xlu0 %v1088
        %v1090 = vpop.xlane.xlu0 %1089
        %v1091 = vadd.f32 %v900, %v901
        %1092 = vadd.xlane.f32.xlu0 %v1091
        %v1093 = vpop.xlane.xlu0 %1092
        %v1094 = vadd.f32 %v902, %v903
        %1095 = vadd.xlane.f32.xlu0 %v1094
        %v1096 = vpop.xlane.xlu0 %1095
        %v1097 = vadd.f32 %v904, %v905
        %1098 = vadd.xlane.f32.xlu0 %v1097
        %v1099 = vpop.xlane.xlu0 %1098
        %v1100 = vadd.f32 %v906, %v907
        %1101 = vadd.xlane.f32.xlu0 %v1100
        %v1102 = vpop.xlane.xlu0 %1101
        %v1103 = vadd.f32 %v908, %v909
        %1104 = vadd.xlane.f32.xlu0 %v1103
        %v1105 = vpop.xlane.xlu0 %1104
        %v1106 = vadd.f32 %v910, %v911
        %1107 = vadd.xlane.f32.xlu0 %v1106
        %v1108 = vpop.xlane.xlu0 %1107
        %v1109 = vadd.f32 %v912, %v913
        %1110 = vadd.xlane.f32.xlu0 %v1109
        %v1111 = vpop.xlane.xlu0 %1110
        %v1112 = vadd.f32 %v914, %v915
        %1113 = vadd.xlane.f32.xlu0 %v1112
        %v1114 = vpop.xlane.xlu0 %1113
        %v1115 = vadd.f32 %v916, %v917
        %1116 = vadd.xlane.f32.xlu0 %v1115
        %v1117 = vpop.xlane.xlu0 %1116
        %v1118 = vadd.f32 %v918, %v919
        %1119 = vadd.xlane.f32.xlu0 %v1118
        %v1120 = vpop.xlane.xlu0 %1119
        %v1121 = vadd.f32 %v920, %v921
        %1122 = vadd.xlane.f32.xlu0 %v1121
        %v1123 = vpop.xlane.xlu0 %1122
        %v1124 = vadd.f32 %v922, %v923
        %1125 = vadd.xlane.f32.xlu0 %v1124
        %v1126 = vpop.xlane.xlu0 %1125
        %v1127 = vadd.f32 %v924, %v925
        %1128 = vadd.xlane.f32.xlu0 %v1127
        %v1129 = vpop.xlane.xlu0 %1128
        %v1130 = vadd.f32 %v926, %v927
        %1131 = vadd.xlane.f32.xlu0 %v1130
        %v1132 = vpop.xlane.xlu0 %1131
        %v1133 = vadd.f32 %v928, %v929
        %1134 = vadd.xlane.f32.xlu0 %v1133
        %v1135 = vpop.xlane.xlu0 %1134
        %v1136 = vadd.f32 %v930, %v931
        %1137 = vadd.xlane.f32.xlu0 %v1136
        %v1138 = vpop.xlane.xlu0 %1137
        %v1139 = vadd.f32 %v932, %v933
        %1140 = vadd.xlane.f32.xlu0 %v1139
        %v1141 = vpop.xlane.xlu0 %1140
        %v1142 = vadd.f32 %v934, %v935
        %1143 = vadd.xlane.f32.xlu0 %v1142
        %v1144 = vpop.xlane.xlu0 %1143
        %v1145 = vadd.f32 %v936, %v937
        %1146 = vadd.xlane.f32.xlu0 %v1145
        %v1147 = vpop.xlane.xlu0 %1146
        %v1148 = vadd.f32 %v938, %v939
        %1149 = vadd.xlane.f32.xlu0 %v1148
        %v1150 = vpop.xlane.xlu0 %1149
        %v1151 = vadd.f32 %v940, %v941
        %1152 = vadd.xlane.f32.xlu0 %v1151
        %v1153 = vpop.xlane.xlu0 %1152
        %v1154 = vadd.f32 %v942, %v943
        %1155 = vadd.xlane.f32.xlu0 %v1154
        %v1156 = vpop.xlane.xlu0 %1155
        %v1157 = vadd.f32 %v944, %v945
        %1158 = vadd.xlane.f32.xlu0 %v1157
        %v1159 = vpop.xlane.xlu0 %1158
        %v1160 = vadd.f32 %v946, %v947
        %1161 = vadd.xlane.f32.xlu0 %v1160
        %v1162 = vpop.xlane.xlu0 %1161
        %v1163 = vadd.f32 %v948, %v949
        %1164 = vadd.xlane.f32.xlu0 %v1163
        %v1165 = vpop.xlane.xlu0 %1164
        %v1166 = vadd.f32 %v950, %v951
        %1167 = vadd.xlane.f32.xlu0 %v1166
        %v1168 = vpop.xlane.xlu0 %1167
        %v1169 = vadd.f32 %v952, %v953
        %1170 = vadd.xlane.f32.xlu0 %v1169
        %v1171 = vpop.xlane.xlu0 %1170
        %v1172 = vadd.f32 %v954, %v955
        %1173 = vadd.xlane.f32.xlu0 %v1172
        %v1174 = vpop.xlane.xlu0 %1173
        %v1175 = vadd.f32 %v956, %v957
        %1176 = vadd.xlane.f32.xlu0 %v1175
        %v1177 = vpop.xlane.xlu0 %1176
        %v1178 = vadd.f32 %v958, %v959
        %1179 = vadd.xlane.f32.xlu0 %v1178
        %v1180 = vpop.xlane.xlu0 %1179
        %v1181 = vadd.f32 %v960, %v961
        %1182 = vadd.xlane.f32.xlu0 %v1181
        %v1183 = vpop.xlane.xlu0 %1182
        %v1184 = vadd.f32 %v962, %v963
        %1185 = vadd.xlane.f32.xlu0 %v1184
        %v1186 = vpop.xlane.xlu0 %1185
        %v1187 = vadd.f32 %v964, %v965
        %1188 = vadd.xlane.f32.xlu0 %v1187
        %v1189 = vpop.xlane.xlu0 %1188
        %v1190 = vadd.f32 %v966, %v967
        %1191 = vadd.xlane.f32.xlu0 %v1190
        %v1192 = vpop.xlane.xlu0 %1191
        %v1193 = vmul.f32 %v970, 0.003921569
        %v1194 = vmul.f32 %v973, 0.003921569
        %v1195 = vmul.f32 %v976, 0.003921569
        %v1196 = vmul.f32 %v979, 0.003921569
        %v1197 = vmul.f32 %v982, 0.003921569
        %v1198 = vmul.f32 %v985, 0.003921569
        %v1199 = vmul.f32 %v988, 0.003921569
        %v1200 = vmul.f32 %v991, 0.003921569
        %v1201 = vmul.f32 %v994, 0.003921569
        %v1202 = vmul.f32 %v997, 0.003921569
        %v1203 = vmul.f32 %v1000, 0.003921569
        %v1204 = vmul.f32 %v1003, 0.003921569
        %v1205 = vmul.f32 %v1006, 0.003921569
        %v1206 = vmul.f32 %v1009, 0.003921569
        %v1207 = vmul.f32 %v1012, 0.003921569
        %v1208 = vmul.f32 %v1015, 0.003921569
        %v1209 = vmul.f32 %v1018, 0.003921569
        %v1210 = vmul.f32 %v1021, 0.003921569
        %v1211 = vmul.f32 %v1024, 0.003921569
        %v1212 = vmul.f32 %v1027, 0.003921569
        %v1213 = vmul.f32 %v1030, 0.003921569
        %v1214 = vmul.f32 %v1033, 0.003921569
        %v1215 = vmul.f32 %v1036, 0.003921569
        %v1216 = vmul.f32 %v1039, 0.003921569
        %v1217 = vmul.f32 %v1042, 0.003921569
        %v1218 = vmul.f32 %v1045, 0.003921569
        %v1219 = vmul.f32 %v1048, 0.003921569
        %v1220 = vmul.f32 %v1051, 0.003921569
        %v1221 = vmul.f32 %v1054, 0.003921569
        %v1222 = vmul.f32 %v1057, 0.003921569
        %v1223 = vmul.f32 %v1060, 0.003921569
        %v1224 = vmul.f32 %v1063, 0.003921569
        %v1225 = vmul.f32 %v1066, 0.003921569
        %v1226 = vmul.f32 %v1069, 0.003921569
        %v1227 = vmul.f32 %v1072, 0.003921569
        %v1228 = vmul.f32 %v1075, 0.003921569
        %v1229 = vmul.f32 %v1078, 0.003921569
        %v1230 = vmul.f32 %v1081, 0.003921569
        %v1231 = vmul.f32 %v1084, 0.003921569
        %v1232 = vmul.f32 %v1087, 0.003921569
        %v1233 = vmul.f32 %v1090, 0.003921569
        %v1234 = vmul.f32 %v1093, 0.003921569
        %v1235 = vmul.f32 %v1096, 0.003921569
        %v1236 = vmul.f32 %v1099, 0.003921569
        %v1237 = vmul.f32 %v1102, 0.003921569
        %v1238 = vmul.f32 %v1105, 0.003921569
        %v1239 = vmul.f32 %v1108, 0.003921569
        %v1240 = vmul.f32 %v1111, 0.003921569
        %v1241 = vmul.f32 %v1114, 0.003921569
        %v1242 = vmul.f32 %v1117, 0.003921569
        %v1243 = vmul.f32 %v1120, 0.003921569
        %v1244 = vmul.f32 %v1123, 0.003921569
        %v1245 = vmul.f32 %v1126, 0.003921569
        %v1246 = vmul.f32 %v1129, 0.003921569
        %v1247 = vmul.f32 %v1132, 0.003921569
        %v1248 = vmul.f32 %v1135, 0.003921569
        %v1249 = vmul.f32 %v1138, 0.003921569
        %v1250 = vmul.f32 %v1141, 0.003921569
        %v1251 = vmul.f32 %v1144, 0.003921569
        %v1252 = vmul.f32 %v1147, 0.003921569
        %v1253 = vmul.f32 %v1150, 0.003921569
        %v1254 = vmul.f32 %v1153, 0.003921569
        %v1255 = vmul.f32 %v1156, 0.003921569
        %v1256 = vmul.f32 %v1159, 0.003921569
        %v1257 = vmul.f32 %v1162, 0.003921569
        %v1258 = vmul.f32 %v1165, 0.003921569
        %v1259 = vmul.f32 %v1168, 0.003921569
        %v1260 = vmul.f32 %v1171, 0.003921569
        %v1261 = vmul.f32 %v1174, 0.003921569
        %v1262 = vmul.f32 %v1177, 0.003921569
        %v1263 = vmul.f32 %v1180, 0.003921569
        %v1264 = vmul.f32 %v1183, 0.003921569
        %v1265 = vmul.f32 %v1186, 0.003921569
        %v1266 = vmul.f32 %v1189, 0.003921569
        %v1267 = vmul.f32 %v1192, 0.003921569
        %v1268 = vrsqrt.pop %v1193
        %v1269 = vmul.f32 %v1193, %v1268
        %vm1270 = vcmp.eq.f32.partialorder %v1193, inf
        %v1271 = vsel %vm1270, %v1193, %v1269
        %vm1272 = vcmp.eq.f32.partialorder %v1193, 0.0
        %v1273 = vand.u32 %v1193, 2147483648
        %v1274 = vsel %vm1272, %v1273, %v1271
        %v1275 = vrsqrt.pop %v1194
        %v1276 = vmul.f32 %v1194, %v1275
        %vm1277 = vcmp.eq.f32.partialorder %v1194, inf
        %v1278 = vsel %vm1277, %v1194, %v1276
        %vm1279 = vcmp.eq.f32.partialorder %v1194, 0.0
        %v1280 = vand.u32 %v1194, 2147483648
        %v1281 = vsel %vm1279, %v1280, %v1278
        %v1282 = vrsqrt.pop %v1195
        %v1283 = vmul.f32 %v1195, %v1282
        %vm1284 = vcmp.eq.f32.partialorder %v1195, inf
        %v1285 = vsel %vm1284, %v1195, %v1283
        %vm1286 = vcmp.eq.f32.partialorder %v1195, 0.0
        %v1287 = vand.u32 %v1195, 2147483648
        %v1288 = vsel %vm1286, %v1287, %v1285
        %v1289 = vrsqrt.pop %v1196
        %v1290 = vmul.f32 %v1196, %v1289
        %vm1291 = vcmp.eq.f32.partialorder %v1196, inf
        %v1292 = vsel %vm1291, %v1196, %v1290
        %vm1293 = vcmp.eq.f32.partialorder %v1196, 0.0
        %v1294 = vand.u32 %v1196, 2147483648
        %v1295 = vsel %vm1293, %v1294, %v1292
        %v1296 = vrsqrt.pop %v1197
        %v1297 = vmul.f32 %v1197, %v1296
        %vm1298 = vcmp.eq.f32.partialorder %v1197, inf
        %v1299 = vsel %vm1298, %v1197, %v1297
        %vm1300 = vcmp.eq.f32.partialorder %v1197, 0.0
        %v1301 = vand.u32 %v1197, 2147483648
        %v1302 = vsel %vm1300, %v1301, %v1299
        %v1303 = vrsqrt.pop %v1198
        %v1304 = vmul.f32 %v1198, %v1303
        %vm1305 = vcmp.eq.f32.partialorder %v1198, inf
        %v1306 = vsel %vm1305, %v1198, %v1304
        %vm1307 = vcmp.eq.f32.partialorder %v1198, 0.0
        %v1308 = vand.u32 %v1198, 2147483648
        %v1309 = vsel %vm1307, %v1308, %v1306
        %v1310 = vrsqrt.pop %v1199
        %v1311 = vmul.f32 %v1199, %v1310
        %vm1312 = vcmp.eq.f32.partialorder %v1199, inf
        %v1313 = vsel %vm1312, %v1199, %v1311
        %vm1314 = vcmp.eq.f32.partialorder %v1199, 0.0
        %v1315 = vand.u32 %v1199, 2147483648
        %v1316 = vsel %vm1314, %v1315, %v1313
        %v1317 = vrsqrt.pop %v1200
        %v1318 = vmul.f32 %v1200, %v1317
        %vm1319 = vcmp.eq.f32.partialorder %v1200, inf
        %v1320 = vsel %vm1319, %v1200, %v1318
        %vm1321 = vcmp.eq.f32.partialorder %v1200, 0.0
        %v1322 = vand.u32 %v1200, 2147483648
        %v1323 = vsel %vm1321, %v1322, %v1320
        %v1324 = vrsqrt.pop %v1201
        %v1325 = vmul.f32 %v1201, %v1324
        %vm1326 = vcmp.eq.f32.partialorder %v1201, inf
        %v1327 = vsel %vm1326, %v1201, %v1325
        %vm1328 = vcmp.eq.f32.partialorder %v1201, 0.0
        %v1329 = vand.u32 %v1201, 2147483648
        %v1330 = vsel %vm1328, %v1329, %v1327
        %v1331 = vrsqrt.pop %v1202
        %v1332 = vmul.f32 %v1202, %v1331
        %vm1333 = vcmp.eq.f32.partialorder %v1202, inf
        %v1334 = vsel %vm1333, %v1202, %v1332
        %vm1335 = vcmp.eq.f32.partialorder %v1202, 0.0
        %v1336 = vand.u32 %v1202, 2147483648
        %v1337 = vsel %vm1335, %v1336, %v1334
        %v1338 = vrsqrt.pop %v1203
        %v1339 = vmul.f32 %v1203, %v1338
        %vm1340 = vcmp.eq.f32.partialorder %v1203, inf
        %v1341 = vsel %vm1340, %v1203, %v1339
        %vm1342 = vcmp.eq.f32.partialorder %v1203, 0.0
        %v1343 = vand.u32 %v1203, 2147483648
        %v1344 = vsel %vm1342, %v1343, %v1341
        %v1345 = vrsqrt.pop %v1204
        %v1346 = vmul.f32 %v1204, %v1345
        %vm1347 = vcmp.eq.f32.partialorder %v1204, inf
        %v1348 = vsel %vm1347, %v1204, %v1346
        %vm1349 = vcmp.eq.f32.partialorder %v1204, 0.0
        %v1350 = vand.u32 %v1204, 2147483648
        %v1351 = vsel %vm1349, %v1350, %v1348
        %v1352 = vrsqrt.pop %v1205
        %v1353 = vmul.f32 %v1205, %v1352
        %vm1354 = vcmp.eq.f32.partialorder %v1205, inf
        %v1355 = vsel %vm1354, %v1205, %v1353
        %vm1356 = vcmp.eq.f32.partialorder %v1205, 0.0
        %v1357 = vand.u32 %v1205, 2147483648
        %v1358 = vsel %vm1356, %v1357, %v1355
        %v1359 = vrsqrt.pop %v1206
        %v1360 = vmul.f32 %v1206, %v1359
        %vm1361 = vcmp.eq.f32.partialorder %v1206, inf
        %v1362 = vsel %vm1361, %v1206, %v1360
        %vm1363 = vcmp.eq.f32.partialorder %v1206, 0.0
        %v1364 = vand.u32 %v1206, 2147483648
        %v1365 = vsel %vm1363, %v1364, %v1362
        %v1366 = vrsqrt.pop %v1207
        %v1367 = vmul.f32 %v1207, %v1366
        %vm1368 = vcmp.eq.f32.partialorder %v1207, inf
        %v1369 = vsel %vm1368, %v1207, %v1367
        %vm1370 = vcmp.eq.f32.partialorder %v1207, 0.0
        %v1371 = vand.u32 %v1207, 2147483648
        %v1372 = vsel %vm1370, %v1371, %v1369
        %v1373 = vrsqrt.pop %v1208
        %v1374 = vmul.f32 %v1208, %v1373
        %vm1375 = vcmp.eq.f32.partialorder %v1208, inf
        %v1376 = vsel %vm1375, %v1208, %v1374
        %vm1377 = vcmp.eq.f32.partialorder %v1208, 0.0
        %v1378 = vand.u32 %v1208, 2147483648
        %v1379 = vsel %vm1377, %v1378, %v1376
        %v1380 = vrsqrt.pop %v1209
        %v1381 = vmul.f32 %v1209, %v1380
        %vm1382 = vcmp.eq.f32.partialorder %v1209, inf
        %v1383 = vsel %vm1382, %v1209, %v1381
        %vm1384 = vcmp.eq.f32.partialorder %v1209, 0.0
        %v1385 = vand.u32 %v1209, 2147483648
        %v1386 = vsel %vm1384, %v1385, %v1383
        %v1387 = vrsqrt.pop %v1210
        %v1388 = vmul.f32 %v1210, %v1387
        %vm1389 = vcmp.eq.f32.partialorder %v1210, inf
        %v1390 = vsel %vm1389, %v1210, %v1388
        %vm1391 = vcmp.eq.f32.partialorder %v1210, 0.0
        %v1392 = vand.u32 %v1210, 2147483648
        %v1393 = vsel %vm1391, %v1392, %v1390
        %v1394 = vrsqrt.pop %v1211
        %v1395 = vmul.f32 %v1211, %v1394
        %vm1396 = vcmp.eq.f32.partialorder %v1211, inf
        %v1397 = vsel %vm1396, %v1211, %v1395
        %vm1398 = vcmp.eq.f32.partialorder %v1211, 0.0
        %v1399 = vand.u32 %v1211, 2147483648
        %v1400 = vsel %vm1398, %v1399, %v1397
        %v1401 = vrsqrt.pop %v1212
        %v1402 = vmul.f32 %v1212, %v1401
        %vm1403 = vcmp.eq.f32.partialorder %v1212, inf
        %v1404 = vsel %vm1403, %v1212, %v1402
        %vm1405 = vcmp.eq.f32.partialorder %v1212, 0.0
        %v1406 = vand.u32 %v1212, 2147483648
        %v1407 = vsel %vm1405, %v1406, %v1404
        %v1408 = vrsqrt.pop %v1213
        %v1409 = vmul.f32 %v1213, %v1408
        %vm1410 = vcmp.eq.f32.partialorder %v1213, inf
        %v1411 = vsel %vm1410, %v1213, %v1409
        %vm1412 = vcmp.eq.f32.partialorder %v1213, 0.0
        %v1413 = vand.u32 %v1213, 2147483648
        %v1414 = vsel %vm1412, %v1413, %v1411
        %v1415 = vrsqrt.pop %v1214
        %v1416 = vmul.f32 %v1214, %v1415
        %vm1417 = vcmp.eq.f32.partialorder %v1214, inf
        %v1418 = vsel %vm1417, %v1214, %v1416
        %vm1419 = vcmp.eq.f32.partialorder %v1214, 0.0
        %v1420 = vand.u32 %v1214, 2147483648
        %v1421 = vsel %vm1419, %v1420, %v1418
        %v1422 = vrsqrt.pop %v1215
        %v1423 = vmul.f32 %v1215, %v1422
        %vm1424 = vcmp.eq.f32.partialorder %v1215, inf
        %v1425 = vsel %vm1424, %v1215, %v1423
        %vm1426 = vcmp.eq.f32.partialorder %v1215, 0.0
        %v1427 = vand.u32 %v1215, 2147483648
        %v1428 = vsel %vm1426, %v1427, %v1425
        %v1429 = vrsqrt.pop %v1216
        %v1430 = vmul.f32 %v1216, %v1429
        %vm1431 = vcmp.eq.f32.partialorder %v1216, inf
        %v1432 = vsel %vm1431, %v1216, %v1430
        %vm1433 = vcmp.eq.f32.partialorder %v1216, 0.0
        %v1434 = vand.u32 %v1216, 2147483648
        %v1435 = vsel %vm1433, %v1434, %v1432
        %v1436 = vrsqrt.pop %v1217
        %v1437 = vmul.f32 %v1217, %v1436
        %vm1438 = vcmp.eq.f32.partialorder %v1217, inf
        %v1439 = vsel %vm1438, %v1217, %v1437
        %vm1440 = vcmp.eq.f32.partialorder %v1217, 0.0
        %v1441 = vand.u32 %v1217, 2147483648
        %v1442 = vsel %vm1440, %v1441, %v1439
        %v1443 = vrsqrt.pop %v1218
        %v1444 = vmul.f32 %v1218, %v1443
        %vm1445 = vcmp.eq.f32.partialorder %v1218, inf
        %v1446 = vsel %vm1445, %v1218, %v1444
        %vm1447 = vcmp.eq.f32.partialorder %v1218, 0.0
        %v1448 = vand.u32 %v1218, 2147483648
        %v1449 = vsel %vm1447, %v1448, %v1446
        %v1450 = vrsqrt.pop %v1219
        %v1451 = vmul.f32 %v1219, %v1450
        %vm1452 = vcmp.eq.f32.partialorder %v1219, inf
        %v1453 = vsel %vm1452, %v1219, %v1451
        %vm1454 = vcmp.eq.f32.partialorder %v1219, 0.0
        %v1455 = vand.u32 %v1219, 2147483648
        %v1456 = vsel %vm1454, %v1455, %v1453
        %v1457 = vrsqrt.pop %v1220
        %v1458 = vmul.f32 %v1220, %v1457
        %vm1459 = vcmp.eq.f32.partialorder %v1220, inf
        %v1460 = vsel %vm1459, %v1220, %v1458
        %vm1461 = vcmp.eq.f32.partialorder %v1220, 0.0
        %v1462 = vand.u32 %v1220, 2147483648
        %v1463 = vsel %vm1461, %v1462, %v1460
        %v1464 = vrsqrt.pop %v1221
        %v1465 = vmul.f32 %v1221, %v1464
        %vm1466 = vcmp.eq.f32.partialorder %v1221, inf
        %v1467 = vsel %vm1466, %v1221, %v1465
        %vm1468 = vcmp.eq.f32.partialorder %v1221, 0.0
        %v1469 = vand.u32 %v1221, 2147483648
        %v1470 = vsel %vm1468, %v1469, %v1467
        %v1471 = vrsqrt.pop %v1222
        %v1472 = vmul.f32 %v1222, %v1471
        %vm1473 = vcmp.eq.f32.partialorder %v1222, inf
        %v1474 = vsel %vm1473, %v1222, %v1472
        %vm1475 = vcmp.eq.f32.partialorder %v1222, 0.0
        %v1476 = vand.u32 %v1222, 2147483648
        %v1477 = vsel %vm1475, %v1476, %v1474
        %v1478 = vrsqrt.pop %v1223
        %v1479 = vmul.f32 %v1223, %v1478
        %vm1480 = vcmp.eq.f32.partialorder %v1223, inf
        %v1481 = vsel %vm1480, %v1223, %v1479
        %vm1482 = vcmp.eq.f32.partialorder %v1223, 0.0
        %v1483 = vand.u32 %v1223, 2147483648
        %v1484 = vsel %vm1482, %v1483, %v1481
        %v1485 = vrsqrt.pop %v1224
        %v1486 = vmul.f32 %v1224, %v1485
        %vm1487 = vcmp.eq.f32.partialorder %v1224, inf
        %v1488 = vsel %vm1487, %v1224, %v1486
        %vm1489 = vcmp.eq.f32.partialorder %v1224, 0.0
        %v1490 = vand.u32 %v1224, 2147483648
        %v1491 = vsel %vm1489, %v1490, %v1488
        %v1492 = vrsqrt.pop %v1225
        %v1493 = vmul.f32 %v1225, %v1492
        %vm1494 = vcmp.eq.f32.partialorder %v1225, inf
        %v1495 = vsel %vm1494, %v1225, %v1493
        %vm1496 = vcmp.eq.f32.partialorder %v1225, 0.0
        %v1497 = vand.u32 %v1225, 2147483648
        %v1498 = vsel %vm1496, %v1497, %v1495
        %v1499 = vrsqrt.pop %v1226
        %v1500 = vmul.f32 %v1226, %v1499
        %vm1501 = vcmp.eq.f32.partialorder %v1226, inf
        %v1502 = vsel %vm1501, %v1226, %v1500
        %vm1503 = vcmp.eq.f32.partialorder %v1226, 0.0
        %v1504 = vand.u32 %v1226, 2147483648
        %v1505 = vsel %vm1503, %v1504, %v1502
        %v1506 = vrsqrt.pop %v1227
        %v1507 = vmul.f32 %v1227, %v1506
        %vm1508 = vcmp.eq.f32.partialorder %v1227, inf
        %v1509 = vsel %vm1508, %v1227, %v1507
        %vm1510 = vcmp.eq.f32.partialorder %v1227, 0.0
        %v1511 = vand.u32 %v1227, 2147483648
        %v1512 = vsel %vm1510, %v1511, %v1509
        %v1513 = vrsqrt.pop %v1228
        %v1514 = vmul.f32 %v1228, %v1513
        %vm1515 = vcmp.eq.f32.partialorder %v1228, inf
        %v1516 = vsel %vm1515, %v1228, %v1514
        %vm1517 = vcmp.eq.f32.partialorder %v1228, 0.0
        %v1518 = vand.u32 %v1228, 2147483648
        %v1519 = vsel %vm1517, %v1518, %v1516
        %v1520 = vrsqrt.pop %v1229
        %v1521 = vmul.f32 %v1229, %v1520
        %vm1522 = vcmp.eq.f32.partialorder %v1229, inf
        %v1523 = vsel %vm1522, %v1229, %v1521
        %vm1524 = vcmp.eq.f32.partialorder %v1229, 0.0
        %v1525 = vand.u32 %v1229, 2147483648
        %v1526 = vsel %vm1524, %v1525, %v1523
        %v1527 = vrsqrt.pop %v1230
        %v1528 = vmul.f32 %v1230, %v1527
        %vm1529 = vcmp.eq.f32.partialorder %v1230, inf
        %v1530 = vsel %vm1529, %v1230, %v1528
        %vm1531 = vcmp.eq.f32.partialorder %v1230, 0.0
        %v1532 = vand.u32 %v1230, 2147483648
        %v1533 = vsel %vm1531, %v1532, %v1530
        %v1534 = vrsqrt.pop %v1231
        %v1535 = vmul.f32 %v1231, %v1534
        %vm1536 = vcmp.eq.f32.partialorder %v1231, inf
        %v1537 = vsel %vm1536, %v1231, %v1535
        %vm1538 = vcmp.eq.f32.partialorder %v1231, 0.0
        %v1539 = vand.u32 %v1231, 2147483648
        %v1540 = vsel %vm1538, %v1539, %v1537
        %v1541 = vrsqrt.pop %v1232
        %v1542 = vmul.f32 %v1232, %v1541
        %vm1543 = vcmp.eq.f32.partialorder %v1232, inf
        %v1544 = vsel %vm1543, %v1232, %v1542
        %vm1545 = vcmp.eq.f32.partialorder %v1232, 0.0
        %v1546 = vand.u32 %v1232, 2147483648
        %v1547 = vsel %vm1545, %v1546, %v1544
        %v1548 = vrsqrt.pop %v1233
        %v1549 = vmul.f32 %v1233, %v1548
        %vm1550 = vcmp.eq.f32.partialorder %v1233, inf
        %v1551 = vsel %vm1550, %v1233, %v1549
        %vm1552 = vcmp.eq.f32.partialorder %v1233, 0.0
        %v1553 = vand.u32 %v1233, 2147483648
        %v1554 = vsel %vm1552, %v1553, %v1551
        %v1555 = vrsqrt.pop %v1234
        %v1556 = vmul.f32 %v1234, %v1555
        %vm1557 = vcmp.eq.f32.partialorder %v1234, inf
        %v1558 = vsel %vm1557, %v1234, %v1556
        %vm1559 = vcmp.eq.f32.partialorder %v1234, 0.0
        %v1560 = vand.u32 %v1234, 2147483648
        %v1561 = vsel %vm1559, %v1560, %v1558
        %v1562 = vrsqrt.pop %v1235
        %v1563 = vmul.f32 %v1235, %v1562
        %vm1564 = vcmp.eq.f32.partialorder %v1235, inf
        %v1565 = vsel %vm1564, %v1235, %v1563
        %vm1566 = vcmp.eq.f32.partialorder %v1235, 0.0
        %v1567 = vand.u32 %v1235, 2147483648
        %v1568 = vsel %vm1566, %v1567, %v1565
        %v1569 = vrsqrt.pop %v1236
        %v1570 = vmul.f32 %v1236, %v1569
        %vm1571 = vcmp.eq.f32.partialorder %v1236, inf
        %v1572 = vsel %vm1571, %v1236, %v1570
        %vm1573 = vcmp.eq.f32.partialorder %v1236, 0.0
        %v1574 = vand.u32 %v1236, 2147483648
        %v1575 = vsel %vm1573, %v1574, %v1572
        %v1576 = vrsqrt.pop %v1237
        %v1577 = vmul.f32 %v1237, %v1576
        %vm1578 = vcmp.eq.f32.partialorder %v1237, inf
        %v1579 = vsel %vm1578, %v1237, %v1577
        %vm1580 = vcmp.eq.f32.partialorder %v1237, 0.0
        %v1581 = vand.u32 %v1237, 2147483648
        %v1582 = vsel %vm1580, %v1581, %v1579
        %v1583 = vrsqrt.pop %v1238
        %v1584 = vmul.f32 %v1238, %v1583
        %vm1585 = vcmp.eq.f32.partialorder %v1238, inf
        %v1586 = vsel %vm1585, %v1238, %v1584
        %vm1587 = vcmp.eq.f32.partialorder %v1238, 0.0
        %v1588 = vand.u32 %v1238, 2147483648
        %v1589 = vsel %vm1587, %v1588, %v1586
        %v1590 = vrsqrt.pop %v1239
        %v1591 = vmul.f32 %v1239, %v1590
        %vm1592 = vcmp.eq.f32.partialorder %v1239, inf
        %v1593 = vsel %vm1592, %v1239, %v1591
        %vm1594 = vcmp.eq.f32.partialorder %v1239, 0.0
        %v1595 = vand.u32 %v1239, 2147483648
        %v1596 = vsel %vm1594, %v1595, %v1593
        %v1597 = vrsqrt.pop %v1240
        %v1598 = vmul.f32 %v1240, %v1597
        %vm1599 = vcmp.eq.f32.partialorder %v1240, inf
        %v1600 = vsel %vm1599, %v1240, %v1598
        %vm1601 = vcmp.eq.f32.partialorder %v1240, 0.0
        %v1602 = vand.u32 %v1240, 2147483648
        %v1603 = vsel %vm1601, %v1602, %v1600
        %v1604 = vrsqrt.pop %v1241
        %v1605 = vmul.f32 %v1241, %v1604
        %vm1606 = vcmp.eq.f32.partialorder %v1241, inf
        %v1607 = vsel %vm1606, %v1241, %v1605
        %vm1608 = vcmp.eq.f32.partialorder %v1241, 0.0
        %v1609 = vand.u32 %v1241, 2147483648
        %v1610 = vsel %vm1608, %v1609, %v1607
        %v1611 = vrsqrt.pop %v1242
        %v1612 = vmul.f32 %v1242, %v1611
        %vm1613 = vcmp.eq.f32.partialorder %v1242, inf
        %v1614 = vsel %vm1613, %v1242, %v1612
        %vm1615 = vcmp.eq.f32.partialorder %v1242, 0.0
        %v1616 = vand.u32 %v1242, 2147483648
        %v1617 = vsel %vm1615, %v1616, %v1614
        %v1618 = vrsqrt.pop %v1243
        %v1619 = vmul.f32 %v1243, %v1618
        %vm1620 = vcmp.eq.f32.partialorder %v1243, inf
        %v1621 = vsel %vm1620, %v1243, %v1619
        %vm1622 = vcmp.eq.f32.partialorder %v1243, 0.0
        %v1623 = vand.u32 %v1243, 2147483648
        %v1624 = vsel %vm1622, %v1623, %v1621
        %v1625 = vrsqrt.pop %v1244
        %v1626 = vmul.f32 %v1244, %v1625
        %vm1627 = vcmp.eq.f32.partialorder %v1244, inf
        %v1628 = vsel %vm1627, %v1244, %v1626
        %vm1629 = vcmp.eq.f32.partialorder %v1244, 0.0
        %v1630 = vand.u32 %v1244, 2147483648
        %v1631 = vsel %vm1629, %v1630, %v1628
        %v1632 = vrsqrt.pop %v1245
        %v1633 = vmul.f32 %v1245, %v1632
        %vm1634 = vcmp.eq.f32.partialorder %v1245, inf
        %v1635 = vsel %vm1634, %v1245, %v1633
        %vm1636 = vcmp.eq.f32.partialorder %v1245, 0.0
        %v1637 = vand.u32 %v1245, 2147483648
        %v1638 = vsel %vm1636, %v1637, %v1635
        %v1639 = vrsqrt.pop %v1246
        %v1640 = vmul.f32 %v1246, %v1639
        %vm1641 = vcmp.eq.f32.partialorder %v1246, inf
        %v1642 = vsel %vm1641, %v1246, %v1640
        %vm1643 = vcmp.eq.f32.partialorder %v1246, 0.0
        %v1644 = vand.u32 %v1246, 2147483648
        %v1645 = vsel %vm1643, %v1644, %v1642
        %v1646 = vrsqrt.pop %v1247
        %v1647 = vmul.f32 %v1247, %v1646
        %vm1648 = vcmp.eq.f32.partialorder %v1247, inf
        %v1649 = vsel %vm1648, %v1247, %v1647
        %vm1650 = vcmp.eq.f32.partialorder %v1247, 0.0
        %v1651 = vand.u32 %v1247, 2147483648
        %v1652 = vsel %vm1650, %v1651, %v1649
        %v1653 = vrsqrt.pop %v1248
        %v1654 = vmul.f32 %v1248, %v1653
        %vm1655 = vcmp.eq.f32.partialorder %v1248, inf
        %v1656 = vsel %vm1655, %v1248, %v1654
        %vm1657 = vcmp.eq.f32.partialorder %v1248, 0.0
        %v1658 = vand.u32 %v1248, 2147483648
        %v1659 = vsel %vm1657, %v1658, %v1656
        %v1660 = vrsqrt.pop %v1249
        %v1661 = vmul.f32 %v1249, %v1660
        %vm1662 = vcmp.eq.f32.partialorder %v1249, inf
        %v1663 = vsel %vm1662, %v1249, %v1661
        %vm1664 = vcmp.eq.f32.partialorder %v1249, 0.0
        %v1665 = vand.u32 %v1249, 2147483648
        %v1666 = vsel %vm1664, %v1665, %v1663
        %v1667 = vrsqrt.pop %v1250
        %v1668 = vmul.f32 %v1250, %v1667
        %vm1669 = vcmp.eq.f32.partialorder %v1250, inf
        %v1670 = vsel %vm1669, %v1250, %v1668
        %vm1671 = vcmp.eq.f32.partialorder %v1250, 0.0
        %v1672 = vand.u32 %v1250, 2147483648
        %v1673 = vsel %vm1671, %v1672, %v1670
        %v1674 = vrsqrt.pop %v1251
        %v1675 = vmul.f32 %v1251, %v1674
        %vm1676 = vcmp.eq.f32.partialorder %v1251, inf
        %v1677 = vsel %vm1676, %v1251, %v1675
        %vm1678 = vcmp.eq.f32.partialorder %v1251, 0.0
        %v1679 = vand.u32 %v1251, 2147483648
        %v1680 = vsel %vm1678, %v1679, %v1677
        %v1681 = vrsqrt.pop %v1252
        %v1682 = vmul.f32 %v1252, %v1681
        %vm1683 = vcmp.eq.f32.partialorder %v1252, inf
        %v1684 = vsel %vm1683, %v1252, %v1682
        %vm1685 = vcmp.eq.f32.partialorder %v1252, 0.0
        %v1686 = vand.u32 %v1252, 2147483648
        %v1687 = vsel %vm1685, %v1686, %v1684
        %v1688 = vrsqrt.pop %v1253
        %v1689 = vmul.f32 %v1253, %v1688
        %vm1690 = vcmp.eq.f32.partialorder %v1253, inf
        %v1691 = vsel %vm1690, %v1253, %v1689
        %vm1692 = vcmp.eq.f32.partialorder %v1253, 0.0
        %v1693 = vand.u32 %v1253, 2147483648
        %v1694 = vsel %vm1692, %v1693, %v1691
        %v1695 = vrsqrt.pop %v1254
        %v1696 = vmul.f32 %v1254, %v1695
        %vm1697 = vcmp.eq.f32.partialorder %v1254, inf
        %v1698 = vsel %vm1697, %v1254, %v1696
        %vm1699 = vcmp.eq.f32.partialorder %v1254, 0.0
        %v1700 = vand.u32 %v1254, 2147483648
        %v1701 = vsel %vm1699, %v1700, %v1698
        %v1702 = vrsqrt.pop %v1255
        %v1703 = vmul.f32 %v1255, %v1702
        %vm1704 = vcmp.eq.f32.partialorder %v1255, inf
        %v1705 = vsel %vm1704, %v1255, %v1703
        %vm1706 = vcmp.eq.f32.partialorder %v1255, 0.0
        %v1707 = vand.u32 %v1255, 2147483648
        %v1708 = vsel %vm1706, %v1707, %v1705
        %v1709 = vrsqrt.pop %v1256
        %v1710 = vmul.f32 %v1256, %v1709
        %vm1711 = vcmp.eq.f32.partialorder %v1256, inf
        %v1712 = vsel %vm1711, %v1256, %v1710
        %vm1713 = vcmp.eq.f32.partialorder %v1256, 0.0
        %v1714 = vand.u32 %v1256, 2147483648
        %v1715 = vsel %vm1713, %v1714, %v1712
        %v1716 = vrsqrt.pop %v1257
        %v1717 = vmul.f32 %v1257, %v1716
        %vm1718 = vcmp.eq.f32.partialorder %v1257, inf
        %v1719 = vsel %vm1718, %v1257, %v1717
        %vm1720 = vcmp.eq.f32.partialorder %v1257, 0.0
        %v1721 = vand.u32 %v1257, 2147483648
        %v1722 = vsel %vm1720, %v1721, %v1719
        %v1723 = vrsqrt.pop %v1258
        %v1724 = vmul.f32 %v1258, %v1723
        %vm1725 = vcmp.eq.f32.partialorder %v1258, inf
        %v1726 = vsel %vm1725, %v1258, %v1724
        %vm1727 = vcmp.eq.f32.partialorder %v1258, 0.0
        %v1728 = vand.u32 %v1258, 2147483648
        %v1729 = vsel %vm1727, %v1728, %v1726
        %v1730 = vrsqrt.pop %v1259
        %v1731 = vmul.f32 %v1259, %v1730
        %vm1732 = vcmp.eq.f32.partialorder %v1259, inf
        %v1733 = vsel %vm1732, %v1259, %v1731
        %vm1734 = vcmp.eq.f32.partialorder %v1259, 0.0
        %v1735 = vand.u32 %v1259, 2147483648
        %v1736 = vsel %vm1734, %v1735, %v1733
        %v1737 = vrsqrt.pop %v1260
        %v1738 = vmul.f32 %v1260, %v1737
        %vm1739 = vcmp.eq.f32.partialorder %v1260, inf
        %v1740 = vsel %vm1739, %v1260, %v1738
        %vm1741 = vcmp.eq.f32.partialorder %v1260, 0.0
        %v1742 = vand.u32 %v1260, 2147483648
        %v1743 = vsel %vm1741, %v1742, %v1740
        %v1744 = vrsqrt.pop %v1261
        %v1745 = vmul.f32 %v1261, %v1744
        %vm1746 = vcmp.eq.f32.partialorder %v1261, inf
        %v1747 = vsel %vm1746, %v1261, %v1745
        %vm1748 = vcmp.eq.f32.partialorder %v1261, 0.0
        %v1749 = vand.u32 %v1261, 2147483648
        %v1750 = vsel %vm1748, %v1749, %v1747
        %v1751 = vrsqrt.pop %v1262
        %v1752 = vmul.f32 %v1262, %v1751
        %vm1753 = vcmp.eq.f32.partialorder %v1262, inf
        %v1754 = vsel %vm1753, %v1262, %v1752
        %vm1755 = vcmp.eq.f32.partialorder %v1262, 0.0
        %v1756 = vand.u32 %v1262, 2147483648
        %v1757 = vsel %vm1755, %v1756, %v1754
        %v1758 = vrsqrt.pop %v1263
        %v1759 = vmul.f32 %v1263, %v1758
        %vm1760 = vcmp.eq.f32.partialorder %v1263, inf
        %v1761 = vsel %vm1760, %v1263, %v1759
        %vm1762 = vcmp.eq.f32.partialorder %v1263, 0.0
        %v1763 = vand.u32 %v1263, 2147483648
        %v1764 = vsel %vm1762, %v1763, %v1761
        %v1765 = vrsqrt.pop %v1264
        %v1766 = vmul.f32 %v1264, %v1765
        %vm1767 = vcmp.eq.f32.partialorder %v1264, inf
        %v1768 = vsel %vm1767, %v1264, %v1766
        %vm1769 = vcmp.eq.f32.partialorder %v1264, 0.0
        %v1770 = vand.u32 %v1264, 2147483648
        %v1771 = vsel %vm1769, %v1770, %v1768
        %v1772 = vrsqrt.pop %v1265
        %v1773 = vmul.f32 %v1265, %v1772
        %vm1774 = vcmp.eq.f32.partialorder %v1265, inf
        %v1775 = vsel %vm1774, %v1265, %v1773
        %vm1776 = vcmp.eq.f32.partialorder %v1265, 0.0
        %v1777 = vand.u32 %v1265, 2147483648
        %v1778 = vsel %vm1776, %v1777, %v1775
        %v1779 = vrsqrt.pop %v1266
        %v1780 = vmul.f32 %v1266, %v1779
        %vm1781 = vcmp.eq.f32.partialorder %v1266, inf
        %v1782 = vsel %vm1781, %v1266, %v1780
        %vm1783 = vcmp.eq.f32.partialorder %v1266, 0.0
        %v1784 = vand.u32 %v1266, 2147483648
        %v1785 = vsel %vm1783, %v1784, %v1782
        %v1786 = vrsqrt.pop %v1267
        %v1787 = vmul.f32 %v1267, %v1786
        %vm1788 = vcmp.eq.f32.partialorder %v1267, inf
        %v1789 = vsel %vm1788, %v1267, %v1787
        %vm1790 = vcmp.eq.f32.partialorder %v1267, 0.0
        %v1791 = vand.u32 %v1267, 2147483648
        %v1792 = vsel %vm1790, %v1791, %v1789
        %v1793 = vadd.f32 %v1274, 0.001
        %v1794 = vadd.f32 %v1281, 0.001
        %v1795 = vadd.f32 %v1288, 0.001
        %v1796 = vadd.f32 %v1295, 0.001
        %v1797 = vadd.f32 %v1302, 0.001
        %v1798 = vadd.f32 %v1309, 0.001
        %v1799 = vadd.f32 %v1316, 0.001
        %v1800 = vadd.f32 %v1323, 0.001
        %v1801 = vadd.f32 %v1330, 0.001
        %v1802 = vadd.f32 %v1337, 0.001
        %v1803 = vadd.f32 %v1344, 0.001
        %v1804 = vadd.f32 %v1351, 0.001
        %v1805 = vadd.f32 %v1358, 0.001
        %v1806 = vadd.f32 %v1365, 0.001
        %v1807 = vadd.f32 %v1372, 0.001
        %v1808 = vadd.f32 %v1379, 0.001
        %v1809 = vadd.f32 %v1386, 0.001
        %v1810 = vadd.f32 %v1393, 0.001
        %v1811 = vadd.f32 %v1400, 0.001
        %v1812 = vadd.f32 %v1407, 0.001
        %v1813 = vadd.f32 %v1414, 0.001
        %v1814 = vadd.f32 %v1421, 0.001
        %v1815 = vadd.f32 %v1428, 0.001
        %v1816 = vadd.f32 %v1435, 0.001
        %v1817 = vadd.f32 %v1442, 0.001
        %v1818 = vadd.f32 %v1449, 0.001
        %v1819 = vadd.f32 %v1456, 0.001
        %v1820 = vadd.f32 %v1463, 0.001
        %v1821 = vadd.f32 %v1470, 0.001
        %v1822 = vadd.f32 %v1477, 0.001
        %v1823 = vadd.f32 %v1484, 0.001
        %v1824 = vadd.f32 %v1491, 0.001
        %v1825 = vadd.f32 %v1498, 0.001
        %v1826 = vadd.f32 %v1505, 0.001
        %v1827 = vadd.f32 %v1512, 0.001
        %v1828 = vadd.f32 %v1519, 0.001
        %v1829 = vadd.f32 %v1526, 0.001
        %v1830 = vadd.f32 %v1533, 0.001
        %v1831 = vadd.f32 %v1540, 0.001
        %v1832 = vadd.f32 %v1547, 0.001
        %v1833 = vadd.f32 %v1554, 0.001
        %v1834 = vadd.f32 %v1561, 0.001
        %v1835 = vadd.f32 %v1568, 0.001
        %v1836 = vadd.f32 %v1575, 0.001
        %v1837 = vadd.f32 %v1582, 0.001
        %v1838 = vadd.f32 %v1589, 0.001
        %v1839 = vadd.f32 %v1596, 0.001
        %v1840 = vadd.f32 %v1603, 0.001
        %v1841 = vadd.f32 %v1610, 0.001
        %v1842 = vadd.f32 %v1617, 0.001
        %v1843 = vadd.f32 %v1624, 0.001
        %v1844 = vadd.f32 %v1631, 0.001
        %v1845 = vadd.f32 %v1638, 0.001
        %v1846 = vadd.f32 %v1645, 0.001
        %v1847 = vadd.f32 %v1652, 0.001
        %v1848 = vadd.f32 %v1659, 0.001
        %v1849 = vadd.f32 %v1666, 0.001
        %v1850 = vadd.f32 %v1673, 0.001
        %v1851 = vadd.f32 %v1680, 0.001
        %v1852 = vadd.f32 %v1687, 0.001
        %v1853 = vadd.f32 %v1694, 0.001
        %v1854 = vadd.f32 %v1701, 0.001
        %v1855 = vadd.f32 %v1708, 0.001
        %v1856 = vadd.f32 %v1715, 0.001
        %v1857 = vadd.f32 %v1722, 0.001
        %v1858 = vadd.f32 %v1729, 0.001
        %v1859 = vadd.f32 %v1736, 0.001
        %v1860 = vadd.f32 %v1743, 0.001
        %v1861 = vadd.f32 %v1750, 0.001
        %v1862 = vadd.f32 %v1757, 0.001
        %v1863 = vadd.f32 %v1764, 0.001
        %v1864 = vadd.f32 %v1771, 0.001
        %v1865 = vadd.f32 %v1778, 0.001
        %v1866 = vadd.f32 %v1785, 0.001
        %v1867 = vadd.f32 %v1792, 0.001
        %v1868 = vrcp.pop %v1793
        %v1869 = vrcp.pop %v1794
        %v1870 = vrcp.pop %v1795
        %v1871 = vrcp.pop %v1796
        %v1872 = vrcp.pop %v1797
        %v1873 = vrcp.pop %v1798
        %v1874 = vrcp.pop %v1799
        %v1875 = vrcp.pop %v1800
        %v1876 = vrcp.pop %v1801
        %v1877 = vrcp.pop %v1802
        %v1878 = vrcp.pop %v1803
        %v1879 = vrcp.pop %v1804
        %v1880 = vrcp.pop %v1805
        %v1881 = vrcp.pop %v1806
        %v1882 = vrcp.pop %v1807
        %v1883 = vrcp.pop %v1808
        %v1884 = vrcp.pop %v1809
        %v1885 = vrcp.pop %v1810
        %v1886 = vrcp.pop %v1811
        %v1887 = vrcp.pop %v1812
        %v1888 = vrcp.pop %v1813
        %v1889 = vrcp.pop %v1814
        %v1890 = vrcp.pop %v1815
        %v1891 = vrcp.pop %v1816
        %v1892 = vrcp.pop %v1817
        %v1893 = vrcp.pop %v1818
        %v1894 = vrcp.pop %v1819
        %v1895 = vrcp.pop %v1820
        %v1896 = vrcp.pop %v1821
        %v1897 = vrcp.pop %v1822
        %v1898 = vrcp.pop %v1823
        %v1899 = vrcp.pop %v1824
        %v1900 = vrcp.pop %v1825
        %v1901 = vrcp.pop %v1826
        %v1902 = vrcp.pop %v1827
        %v1903 = vrcp.pop %v1828
        %v1904 = vrcp.pop %v1829
        %v1905 = vrcp.pop %v1830
        %v1906 = vrcp.pop %v1831
        %v1907 = vrcp.pop %v1832
        %v1908 = vrcp.pop %v1833
        %v1909 = vrcp.pop %v1834
        %v1910 = vrcp.pop %v1835
        %v1911 = vrcp.pop %v1836
        %v1912 = vrcp.pop %v1837
        %v1913 = vrcp.pop %v1838
        %v1914 = vrcp.pop %v1839
        %v1915 = vrcp.pop %v1840
        %v1916 = vrcp.pop %v1841
        %v1917 = vrcp.pop %v1842
        %v1918 = vrcp.pop %v1843
        %v1919 = vrcp.pop %v1844
        %v1920 = vrcp.pop %v1845
        %v1921 = vrcp.pop %v1846
        %v1922 = vrcp.pop %v1847
        %v1923 = vrcp.pop %v1848
        %v1924 = vrcp.pop %v1849
        %v1925 = vrcp.pop %v1850
        %v1926 = vrcp.pop %v1851
        %v1927 = vrcp.pop %v1852
        %v1928 = vrcp.pop %v1853
        %v1929 = vrcp.pop %v1854
        %v1930 = vrcp.pop %v1855
        %v1931 = vrcp.pop %v1856
        %v1932 = vrcp.pop %v1857
        %v1933 = vrcp.pop %v1858
        %v1934 = vrcp.pop %v1859
        %v1935 = vrcp.pop %v1860
        %v1936 = vrcp.pop %v1861
        %v1937 = vrcp.pop %v1862
        %v1938 = vrcp.pop %v1863
        %v1939 = vrcp.pop %v1864
        %v1940 = vrcp.pop %v1865
        %v1941 = vrcp.pop %v1866
        %v1942 = vrcp.pop %v1867
        %v1943 = vmul.f32 %v668, %v1868
        %v1944 = vmul.f32 %v669, %v1868
        %v1945 = vmul.f32 %v670, %v1869
        %v1946 = vmul.f32 %v671, %v1869
        %v1947 = vmul.f32 %v672, %v1870
        %v1948 = vmul.f32 %v673, %v1870
        %v1949 = vmul.f32 %v674, %v1871
        %v1950 = vmul.f32 %v675, %v1871
        %v1951 = vmul.f32 %v676, %v1872
        %v1952 = vmul.f32 %v677, %v1872
        %v1953 = vmul.f32 %v678, %v1873
        %v1954 = vmul.f32 %v679, %v1873
        %v1955 = vmul.f32 %v680, %v1874
        %v1956 = vmul.f32 %v681, %v1874
        %v1957 = vmul.f32 %v682, %v1875
        %v1958 = vmul.f32 %v683, %v1875
        %v1959 = vmul.f32 %v684, %v1876
        %v1960 = vmul.f32 %v685, %v1876
        %v1961 = vmul.f32 %v686, %v1877
        %v1962 = vmul.f32 %v687, %v1877
        %v1963 = vmul.f32 %v688, %v1878
        %v1964 = vmul.f32 %v689, %v1878
        %v1965 = vmul.f32 %v690, %v1879
        %v1966 = vmul.f32 %v691, %v1879
        %v1967 = vmul.f32 %v692, %v1880
        %v1968 = vmul.f32 %v693, %v1880
        %v1969 = vmul.f32 %v694, %v1881
        %v1970 = vmul.f32 %v695, %v1881
        %v1971 = vmul.f32 %v696, %v1882
        %v1972 = vmul.f32 %v697, %v1882
        %v1973 = vmul.f32 %v698, %v1883
        %v1974 = vmul.f32 %v699, %v1883
        %v1975 = vmul.f32 %v700, %v1884
        %v1976 = vmul.f32 %v701, %v1884
        %v1977 = vmul.f32 %v702, %v1885
        %v1978 = vmul.f32 %v703, %v1885
        %v1979 = vmul.f32 %v704, %v1886
        %v1980 = vmul.f32 %v705, %v1886
        %v1981 = vmul.f32 %v706, %v1887
        %v1982 = vmul.f32 %v707, %v1887
        %v1983 = vmul.f32 %v708, %v1888
        %v1984 = vmul.f32 %v709, %v1888
        %v1985 = vmul.f32 %v710, %v1889
        %v1986 = vmul.f32 %v711, %v1889
        %v1987 = vmul.f32 %v712, %v1890
        %v1988 = vmul.f32 %v713, %v1890
        %v1989 = vmul.f32 %v714, %v1891
        %v1990 = vmul.f32 %v715, %v1891
        %v1991 = vmul.f32 %v716, %v1892
        %v1992 = vmul.f32 %v717, %v1892
        %v1993 = vmul.f32 %v718, %v1893
        %v1994 = vmul.f32 %v719, %v1893
        %v1995 = vmul.f32 %v720, %v1894
        %v1996 = vmul.f32 %v721, %v1894
        %v1997 = vmul.f32 %v722, %v1895
        %v1998 = vmul.f32 %v723, %v1895
        %v1999 = vmul.f32 %v724, %v1896
        %v2000 = vmul.f32 %v725, %v1896
        %v2001 = vmul.f32 %v726, %v1897
        %v2002 = vmul.f32 %v727, %v1897
        %v2003 = vmul.f32 %v728, %v1898
        %v2004 = vmul.f32 %v729, %v1898
        %v2005 = vmul.f32 %v730, %v1899
        %v2006 = vmul.f32 %v731, %v1899
        %v2007 = vmul.f32 %v732, %v1900
        %v2008 = vmul.f32 %v733, %v1900
        %v2009 = vmul.f32 %v734, %v1901
        %v2010 = vmul.f32 %v735, %v1901
        %v2011 = vmul.f32 %v736, %v1902
        %v2012 = vmul.f32 %v737, %v1902
        %v2013 = vmul.f32 %v738, %v1903
        %v2014 = vmul.f32 %v739, %v1903
        %v2015 = vmul.f32 %v740, %v1904
        %v2016 = vmul.f32 %v741, %v1904
        %v2017 = vmul.f32 %v742, %v1905
        %v2018 = vmul.f32 %v743, %v1905
        %v2019 = vmul.f32 %v744, %v1906
        %v2020 = vmul.f32 %v745, %v1906
        %v2021 = vmul.f32 %v746, %v1907
        %v2022 = vmul.f32 %v747, %v1907
        %v2023 = vmul.f32 %v748, %v1908
        %v2024 = vmul.f32 %v749, %v1908
        %v2025 = vmul.f32 %v750, %v1909
        %v2026 = vmul.f32 %v751, %v1909
        %v2027 = vmul.f32 %v752, %v1910
        %v2028 = vmul.f32 %v753, %v1910
        %v2029 = vmul.f32 %v754, %v1911
        %v2030 = vmul.f32 %v755, %v1911
        %v2031 = vmul.f32 %v756, %v1912
        %v2032 = vmul.f32 %v757, %v1912
        %v2033 = vmul.f32 %v758, %v1913
        %v2034 = vmul.f32 %v759, %v1913
        %v2035 = vmul.f32 %v760, %v1914
        %v2036 = vmul.f32 %v761, %v1914
        %v2037 = vmul.f32 %v762, %v1915
        %v2038 = vmul.f32 %v763, %v1915
        %v2039 = vmul.f32 %v764, %v1916
        %v2040 = vmul.f32 %v765, %v1916
        %v2041 = vmul.f32 %v766, %v1917
        %v2042 = vmul.f32 %v767, %v1917
        %v2043 = vmul.f32 %v768, %v1918
        %v2044 = vmul.f32 %v769, %v1918
        %v2045 = vmul.f32 %v770, %v1919
        %v2046 = vmul.f32 %v771, %v1919
        %v2047 = vmul.f32 %v772, %v1920
        %v2048 = vmul.f32 %v773, %v1920
        %v2049 = vmul.f32 %v774, %v1921
        %v2050 = vmul.f32 %v775, %v1921
        %v2051 = vmul.f32 %v776, %v1922
        %v2052 = vmul.f32 %v777, %v1922
        %v2053 = vmul.f32 %v778, %v1923
        %v2054 = vmul.f32 %v779, %v1923
        %v2055 = vmul.f32 %v780, %v1924
        %v2056 = vmul.f32 %v781, %v1924
        %v2057 = vmul.f32 %v782, %v1925
        %v2058 = vmul.f32 %v783, %v1925
        %v2059 = vmul.f32 %v784, %v1926
        %v2060 = vmul.f32 %v785, %v1926
        %v2061 = vmul.f32 %v786, %v1927
        %v2062 = vmul.f32 %v787, %v1927
        %v2063 = vmul.f32 %v788, %v1928
        %v2064 = vmul.f32 %v789, %v1928
        %v2065 = vmul.f32 %v790, %v1929
        %v2066 = vmul.f32 %v791, %v1929
        %v2067 = vmul.f32 %v792, %v1930
        %v2068 = vmul.f32 %v793, %v1930
        %v2069 = vmul.f32 %v794, %v1931
        %v2070 = vmul.f32 %v795, %v1931
        %v2071 = vmul.f32 %v796, %v1932
        %v2072 = vmul.f32 %v797, %v1932
        %v2073 = vmul.f32 %v798, %v1933
        %v2074 = vmul.f32 %v799, %v1933
        %v2075 = vmul.f32 %v800, %v1934
        %v2076 = vmul.f32 %v801, %v1934
        %v2077 = vmul.f32 %v802, %v1935
        %v2078 = vmul.f32 %v803, %v1935
        %v2079 = vmul.f32 %v804, %v1936
        %v2080 = vmul.f32 %v805, %v1936
        %v2081 = vmul.f32 %v806, %v1937
        %v2082 = vmul.f32 %v807, %v1937
        %v2083 = vmul.f32 %v808, %v1938
        %v2084 = vmul.f32 %v809, %v1938
        %v2085 = vmul.f32 %v810, %v1939
        %v2086 = vmul.f32 %v811, %v1939
        %v2087 = vmul.f32 %v812, %v1940
        %v2088 = vmul.f32 %v813, %v1940
        %v2089 = vmul.f32 %v814, %v1941
        %v2090 = vmul.f32 %v815, %v1941
        %v2091 = vmul.f32 %v816, %v1942
        %v2092 = vmul.f32 %v817, %v1942
        %v2093 = vld [vmem:[#allocation5] sm:$0x3]
        %v2095 = vlaneseq
        %v2096 = vshrl.u32 %v2095, 7
        %v2097 = vsub.s32 0, %v2096
        %v2098 = vrot.slane %v2093, %v2097
        %v2099 = vlaneseq
        %v2100 = vshrl.u32 %v2099, 7
        %v2101 = vsub.s32 1, %v2100
        %v2102 = vrot.slane %v2093, %v2101
        %v2105 = vmul.f32 %v1943, %v2098
        %v2106 = vmul.f32 %v1944, %v2102
        %v2107 = vmul.f32 %v1945, %v2098
        %v2108 = vmul.f32 %v1946, %v2102
        %v2109 = vmul.f32 %v1947, %v2098
        %v2110 = vmul.f32 %v1948, %v2102
        %v2111 = vmul.f32 %v1949, %v2098
        %v2112 = vmul.f32 %v1950, %v2102
        %v2113 = vmul.f32 %v1951, %v2098
        %v2114 = vmul.f32 %v1952, %v2102
        %v2115 = vmul.f32 %v1953, %v2098
        %v2116 = vmul.f32 %v1954, %v2102
        %v2117 = vmul.f32 %v1955, %v2098
        %v2118 = vmul.f32 %v1956, %v2102
        %v2119 = vmul.f32 %v1957, %v2098
        %v2120 = vmul.f32 %v1958, %v2102
        %v2121 = vmul.f32 %v1959, %v2098
        %v2122 = vmul.f32 %v1960, %v2102
        %v2123 = vmul.f32 %v1961, %v2098
        %v2124 = vmul.f32 %v1962, %v2102
        %v2125 = vmul.f32 %v1963, %v2098
        %v2126 = vmul.f32 %v1964, %v2102
        %v2127 = vmul.f32 %v1965, %v2098
        %v2128 = vmul.f32 %v1966, %v2102
        %v2129 = vmul.f32 %v1967, %v2098
        %v2130 = vmul.f32 %v1968, %v2102
        %v2131 = vmul.f32 %v1969, %v2098
        %v2132 = vmul.f32 %v1970, %v2102
        %v2133 = vmul.f32 %v1971, %v2098
        %v2134 = vmul.f32 %v1972, %v2102
        %v2135 = vmul.f32 %v1973, %v2098
        %v2136 = vmul.f32 %v1974, %v2102
        %v2137 = vmul.f32 %v1975, %v2098
        %v2138 = vmul.f32 %v1976, %v2102
        %v2139 = vmul.f32 %v1977, %v2098
        %v2140 = vmul.f32 %v1978, %v2102
        %v2141 = vmul.f32 %v1979, %v2098
        %v2142 = vmul.f32 %v1980, %v2102
        %v2143 = vmul.f32 %v1981, %v2098
        %v2144 = vmul.f32 %v1982, %v2102
        %v2145 = vmul.f32 %v1983, %v2098
        %v2146 = vmul.f32 %v1984, %v2102
        %v2147 = vmul.f32 %v1985, %v2098
        %v2148 = vmul.f32 %v1986, %v2102
        %v2149 = vmul.f32 %v1987, %v2098
        %v2150 = vmul.f32 %v1988, %v2102
        %v2151 = vmul.f32 %v1989, %v2098
        %v2152 = vmul.f32 %v1990, %v2102
        %v2153 = vmul.f32 %v1991, %v2098
        %v2154 = vmul.f32 %v1992, %v2102
        %v2155 = vmul.f32 %v1993, %v2098
        %v2156 = vmul.f32 %v1994, %v2102
        %v2157 = vmul.f32 %v1995, %v2098
        %v2158 = vmul.f32 %v1996, %v2102
        %v2159 = vmul.f32 %v1997, %v2098
        %v2160 = vmul.f32 %v1998, %v2102
        %v2161 = vmul.f32 %v1999, %v2098
        %v2162 = vmul.f32 %v2000, %v2102
        %v2163 = vmul.f32 %v2001, %v2098
        %v2164 = vmul.f32 %v2002, %v2102
        %v2165 = vmul.f32 %v2003, %v2098
        %v2166 = vmul.f32 %v2004, %v2102
        %v2167 = vmul.f32 %v2005, %v2098
        %v2168 = vmul.f32 %v2006, %v2102
        %v2169 = vmul.f32 %v2007, %v2098
        %v2170 = vmul.f32 %v2008, %v2102
        %v2171 = vmul.f32 %v2009, %v2098
        %v2172 = vmul.f32 %v2010, %v2102
        %v2173 = vmul.f32 %v2011, %v2098
        %v2174 = vmul.f32 %v2012, %v2102
        %v2175 = vmul.f32 %v2013, %v2098
        %v2176 = vmul.f32 %v2014, %v2102
        %v2177 = vmul.f32 %v2015, %v2098
        %v2178 = vmul.f32 %v2016, %v2102
        %v2179 = vmul.f32 %v2017, %v2098
        %v2180 = vmul.f32 %v2018, %v2102
        %v2181 = vmul.f32 %v2019, %v2098
        %v2182 = vmul.f32 %v2020, %v2102
        %v2183 = vmul.f32 %v2021, %v2098
        %v2184 = vmul.f32 %v2022, %v2102
        %v2185 = vmul.f32 %v2023, %v2098
        %v2186 = vmul.f32 %v2024, %v2102
        %v2187 = vmul.f32 %v2025, %v2098
        %v2188 = vmul.f32 %v2026, %v2102
        %v2189 = vmul.f32 %v2027, %v2098
        %v2190 = vmul.f32 %v2028, %v2102
        %v2191 = vmul.f32 %v2029, %v2098
        %v2192 = vmul.f32 %v2030, %v2102
        %v2193 = vmul.f32 %v2031, %v2098
        %v2194 = vmul.f32 %v2032, %v2102
        %v2195 = vmul.f32 %v2033, %v2098
        %v2196 = vmul.f32 %v2034, %v2102
        %v2197 = vmul.f32 %v2035, %v2098
        %v2198 = vmul.f32 %v2036, %v2102
        %v2199 = vmul.f32 %v2037, %v2098
        %v2200 = vmul.f32 %v2038, %v2102
        %v2201 = vmul.f32 %v2039, %v2098
        %v2202 = vmul.f32 %v2040, %v2102
        %v2203 = vmul.f32 %v2041, %v2098
        %v2204 = vmul.f32 %v2042, %v2102
        %v2205 = vmul.f32 %v2043, %v2098
        %v2206 = vmul.f32 %v2044, %v2102
        %v2207 = vmul.f32 %v2045, %v2098
        %v2208 = vmul.f32 %v2046, %v2102
        %v2209 = vmul.f32 %v2047, %v2098
        %v2210 = vmul.f32 %v2048, %v2102
        %v2211 = vmul.f32 %v2049, %v2098
        %v2212 = vmul.f32 %v2050, %v2102
        %v2213 = vmul.f32 %v2051, %v2098
        %v2214 = vmul.f32 %v2052, %v2102
        %v2215 = vmul.f32 %v2053, %v2098
        %v2216 = vmul.f32 %v2054, %v2102
        %v2217 = vmul.f32 %v2055, %v2098
        %v2218 = vmul.f32 %v2056, %v2102
        %v2219 = vmul.f32 %v2057, %v2098
        %v2220 = vmul.f32 %v2058, %v2102
        %v2221 = vmul.f32 %v2059, %v2098
        %v2222 = vmul.f32 %v2060, %v2102
        %v2223 = vmul.f32 %v2061, %v2098
        %v2224 = vmul.f32 %v2062, %v2102
        %v2225 = vmul.f32 %v2063, %v2098
        %v2226 = vmul.f32 %v2064, %v2102
        %v2227 = vmul.f32 %v2065, %v2098
        %v2228 = vmul.f32 %v2066, %v2102
        %v2229 = vmul.f32 %v2067, %v2098
        %v2230 = vmul.f32 %v2068, %v2102
        %v2231 = vmul.f32 %v2069, %v2098
        %v2232 = vmul.f32 %v2070, %v2102
        %v2233 = vmul.f32 %v2071, %v2098
        %v2234 = vmul.f32 %v2072, %v2102
        %v2235 = vmul.f32 %v2073, %v2098
        %v2236 = vmul.f32 %v2074, %v2102
        %v2237 = vmul.f32 %v2075, %v2098
        %v2238 = vmul.f32 %v2076, %v2102
        %v2239 = vmul.f32 %v2077, %v2098
        %v2240 = vmul.f32 %v2078, %v2102
        %v2241 = vmul.f32 %v2079, %v2098
        %v2242 = vmul.f32 %v2080, %v2102
        %v2243 = vmul.f32 %v2081, %v2098
        %v2244 = vmul.f32 %v2082, %v2102
        %v2245 = vmul.f32 %v2083, %v2098
        %v2246 = vmul.f32 %v2084, %v2102
        %v2247 = vmul.f32 %v2085, %v2098
        %v2248 = vmul.f32 %v2086, %v2102
        %v2249 = vmul.f32 %v2087, %v2098
        %v2250 = vmul.f32 %v2088, %v2102
        %v2251 = vmul.f32 %v2089, %v2098
        %v2252 = vmul.f32 %v2090, %v2102
        %v2253 = vmul.f32 %v2091, %v2098
        %v2254 = vmul.f32 %v2092, %v2102
        %v2255 = vld [vmem:[#allocation7] sm:$0x3]
        %v2257 = vlaneseq
        %v2258 = vshrl.u32 %v2257, 7
        %v2259 = vsub.s32 0, %v2258
        %v2260 = vrot.slane %v2255, %v2259
        %v2261 = vlaneseq
        %v2262 = vshrl.u32 %v2261, 7
        %v2263 = vsub.s32 1, %v2262
        %v2264 = vrot.slane %v2255, %v2263
        %v2267 = vadd.f32 %v2105, %v2260
        %v2268 = vadd.f32 %v2106, %v2264
        %v2269 = vadd.f32 %v2107, %v2260
        %v2270 = vadd.f32 %v2108, %v2264
        %v2271 = vadd.f32 %v2109, %v2260
        %v2272 = vadd.f32 %v2110, %v2264
        %v2273 = vadd.f32 %v2111, %v2260
        %v2274 = vadd.f32 %v2112, %v2264
        %v2275 = vadd.f32 %v2113, %v2260
        %v2276 = vadd.f32 %v2114, %v2264
        %v2277 = vadd.f32 %v2115, %v2260
        %v2278 = vadd.f32 %v2116, %v2264
        %v2279 = vadd.f32 %v2117, %v2260
        %v2280 = vadd.f32 %v2118, %v2264
        %v2281 = vadd.f32 %v2119, %v2260
        %v2282 = vadd.f32 %v2120, %v2264
        %v2283 = vadd.f32 %v2121, %v2260
        %v2284 = vadd.f32 %v2122, %v2264
        %v2285 = vadd.f32 %v2123, %v2260
        %v2286 = vadd.f32 %v2124, %v2264
        %v2287 = vadd.f32 %v2125, %v2260
        %v2288 = vadd.f32 %v2126, %v2264
        %v2289 = vadd.f32 %v2127, %v2260
        %v2290 = vadd.f32 %v2128, %v2264
        %v2291 = vadd.f32 %v2129, %v2260
        %v2292 = vadd.f32 %v2130, %v2264
        %v2293 = vadd.f32 %v2131, %v2260
        %v2294 = vadd.f32 %v2132, %v2264
        %v2295 = vadd.f32 %v2133, %v2260
        %v2296 = vadd.f32 %v2134, %v2264
        %v2297 = vadd.f32 %v2135, %v2260
        %v2298 = vadd.f32 %v2136, %v2264
        %v2299 = vadd.f32 %v2137, %v2260
        %v2300 = vadd.f32 %v2138, %v2264
        %v2301 = vadd.f32 %v2139, %v2260
        %v2302 = vadd.f32 %v2140, %v2264
        %v2303 = vadd.f32 %v2141, %v2260
        %v2304 = vadd.f32 %v2142, %v2264
        %v2305 = vadd.f32 %v2143, %v2260
        %v2306 = vadd.f32 %v2144, %v2264
        %v2307 = vadd.f32 %v2145, %v2260
        %v2308 = vadd.f32 %v2146, %v2264
        %v2309 = vadd.f32 %v2147, %v2260
        %v2310 = vadd.f32 %v2148, %v2264
        %v2311 = vadd.f32 %v2149, %v2260
        %v2312 = vadd.f32 %v2150, %v2264
        %v2313 = vadd.f32 %v2151, %v2260
        %v2314 = vadd.f32 %v2152, %v2264
        %v2315 = vadd.f32 %v2153, %v2260
        %v2316 = vadd.f32 %v2154, %v2264
        %v2317 = vadd.f32 %v2155, %v2260
        %v2318 = vadd.f32 %v2156, %v2264
        %v2319 = vadd.f32 %v2157, %v2260
        %v2320 = vadd.f32 %v2158, %v2264
        %v2321 = vadd.f32 %v2159, %v2260
        %v2322 = vadd.f32 %v2160, %v2264
        %v2323 = vadd.f32 %v2161, %v2260
        %v2324 = vadd.f32 %v2162, %v2264
        %v2325 = vadd.f32 %v2163, %v2260
        %v2326 = vadd.f32 %v2164, %v2264
        %v2327 = vadd.f32 %v2165, %v2260
        %v2328 = vadd.f32 %v2166, %v2264
        %v2329 = vadd.f32 %v2167, %v2260
        %v2330 = vadd.f32 %v2168, %v2264
        %v2331 = vadd.f32 %v2169, %v2260
        %v2332 = vadd.f32 %v2170, %v2264
        %v2333 = vadd.f32 %v2171, %v2260
        %v2334 = vadd.f32 %v2172, %v2264
        %v2335 = vadd.f32 %v2173, %v2260
        %v2336 = vadd.f32 %v2174, %v2264
        %v2337 = vadd.f32 %v2175, %v2260
        %v2338 = vadd.f32 %v2176, %v2264
        %v2339 = vadd.f32 %v2177, %v2260
        %v2340 = vadd.f32 %v2178, %v2264
        %v2341 = vadd.f32 %v2179, %v2260
        %v2342 = vadd.f32 %v2180, %v2264
        %v2343 = vadd.f32 %v2181, %v2260
        %v2344 = vadd.f32 %v2182, %v2264
        %v2345 = vadd.f32 %v2183, %v2260
        %v2346 = vadd.f32 %v2184, %v2264
        %v2347 = vadd.f32 %v2185, %v2260
        %v2348 = vadd.f32 %v2186, %v2264
        %v2349 = vadd.f32 %v2187, %v2260
        %v2350 = vadd.f32 %v2188, %v2264
        %v2351 = vadd.f32 %v2189, %v2260
        %v2352 = vadd.f32 %v2190, %v2264
        %v2353 = vadd.f32 %v2191, %v2260
        %v2354 = vadd.f32 %v2192, %v2264
        %v2355 = vadd.f32 %v2193, %v2260
        %v2356 = vadd.f32 %v2194, %v2264
        %v2357 = vadd.f32 %v2195, %v2260
        %v2358 = vadd.f32 %v2196, %v2264
        %v2359 = vadd.f32 %v2197, %v2260
        %v2360 = vadd.f32 %v2198, %v2264
        %v2361 = vadd.f32 %v2199, %v2260
        %v2362 = vadd.f32 %v2200, %v2264
        %v2363 = vadd.f32 %v2201, %v2260
        %v2364 = vadd.f32 %v2202, %v2264
        %v2365 = vadd.f32 %v2203, %v2260
        %v2366 = vadd.f32 %v2204, %v2264
        %v2367 = vadd.f32 %v2205, %v2260
        %v2368 = vadd.f32 %v2206, %v2264
        %v2369 = vadd.f32 %v2207, %v2260
        %v2370 = vadd.f32 %v2208, %v2264
        %v2371 = vadd.f32 %v2209, %v2260
        %v2372 = vadd.f32 %v2210, %v2264
        %v2373 = vadd.f32 %v2211, %v2260
        %v2374 = vadd.f32 %v2212, %v2264
        %v2375 = vadd.f32 %v2213, %v2260
        %v2376 = vadd.f32 %v2214, %v2264
        %v2377 = vadd.f32 %v2215, %v2260
        %v2378 = vadd.f32 %v2216, %v2264
        %v2379 = vadd.f32 %v2217, %v2260
        %v2380 = vadd.f32 %v2218, %v2264
        %v2381 = vadd.f32 %v2219, %v2260
        %v2382 = vadd.f32 %v2220, %v2264
        %v2383 = vadd.f32 %v2221, %v2260
        %v2384 = vadd.f32 %v2222, %v2264
        %v2385 = vadd.f32 %v2223, %v2260
        %v2386 = vadd.f32 %v2224, %v2264
        %v2387 = vadd.f32 %v2225, %v2260
        %v2388 = vadd.f32 %v2226, %v2264
        %v2389 = vadd.f32 %v2227, %v2260
        %v2390 = vadd.f32 %v2228, %v2264
        %v2391 = vadd.f32 %v2229, %v2260
        %v2392 = vadd.f32 %v2230, %v2264
        %v2393 = vadd.f32 %v2231, %v2260
        %v2394 = vadd.f32 %v2232, %v2264
        %v2395 = vadd.f32 %v2233, %v2260
        %v2396 = vadd.f32 %v2234, %v2264
        %v2397 = vadd.f32 %v2235, %v2260
        %v2398 = vadd.f32 %v2236, %v2264
        %v2399 = vadd.f32 %v2237, %v2260
        %v2400 = vadd.f32 %v2238, %v2264
        %v2401 = vadd.f32 %v2239, %v2260
        %v2402 = vadd.f32 %v2240, %v2264
        %v2403 = vadd.f32 %v2241, %v2260
        %v2404 = vadd.f32 %v2242, %v2264
        %v2405 = vadd.f32 %v2243, %v2260
        %v2406 = vadd.f32 %v2244, %v2264
        %v2407 = vadd.f32 %v2245, %v2260
        %v2408 = vadd.f32 %v2246, %v2264
        %v2409 = vadd.f32 %v2247, %v2260
        %v2410 = vadd.f32 %v2248, %v2264
        %v2411 = vadd.f32 %v2249, %v2260
        %v2412 = vadd.f32 %v2250, %v2264
        %v2413 = vadd.f32 %v2251, %v2260
        %v2414 = vadd.f32 %v2252, %v2264
        %v2415 = vadd.f32 %v2253, %v2260
        %v2416 = vadd.f32 %v2254, %v2264
        %2417 = vst [vmem:[%s214] sm:$0xff] %v2267
        %2418 = vst [vmem:[%s214 + $0x8] sm:$0xff] %v2268
        %2419 = vst [vmem:[%s214 + $0x10] sm:$0xff] %v2269
        %2420 = vst [vmem:[%s214 + $0x18] sm:$0xff] %v2270
        %2421 = vst [vmem:[%s214 + $0x20] sm:$0xff] %v2271
        %2422 = vst [vmem:[%s214 + $0x28] sm:$0xff] %v2272
        %2423 = vst [vmem:[%s214 + $0x30] sm:$0xff] %v2273
        %2424 = vst [vmem:[%s214 + $0x38] sm:$0xff] %v2274
        %2425 = vst [vmem:[%s214 + $0x40] sm:$0xff] %v2275
        %2426 = vst [vmem:[%s214 + $0x48] sm:$0xff] %v2276
        %2427 = vst [vmem:[%s214 + $0x50] sm:$0xff] %v2277
        %2428 = vst [vmem:[%s214 + $0x58] sm:$0xff] %v2278
        %2429 = vst [vmem:[%s214 + $0x60] sm:$0xff] %v2279
        %2430 = vst [vmem:[%s214 + $0x68] sm:$0xff] %v2280
        %2431 = vst [vmem:[%s214 + $0x70] sm:$0xff] %v2281
        %2432 = vst [vmem:[%s214 + $0x78] sm:$0xff] %v2282
        %2433 = vst [vmem:[%s214 + $0x80] sm:$0xff] %v2283
        %2434 = vst [vmem:[%s214 + $0x88] sm:$0xff] %v2284
        %2435 = vst [vmem:[%s214 + $0x90] sm:$0xff] %v2285
        %2436 = vst [vmem:[%s214 + $0x98] sm:$0xff] %v2286
        %2437 = vst [vmem:[%s214 + $0xa0] sm:$0xff] %v2287
        %2438 = vst [vmem:[%s214 + $0xa8] sm:$0xff] %v2288
        %2439 = vst [vmem:[%s214 + $0xb0] sm:$0xff] %v2289
        %2440 = vst [vmem:[%s214 + $0xb8] sm:$0xff] %v2290
        %2441 = vst [vmem:[%s214 + $0xc0] sm:$0xff] %v2291
        %2442 = vst [vmem:[%s214 + $0xc8] sm:$0xff] %v2292
        %2443 = vst [vmem:[%s214 + $0xd0] sm:$0xff] %v2293
        %2444 = vst [vmem:[%s214 + $0xd8] sm:$0xff] %v2294
        %2445 = vst [vmem:[%s214 + $0xe0] sm:$0xff] %v2295
        %2446 = vst [vmem:[%s214 + $0xe8] sm:$0xff] %v2296
        %2447 = vst [vmem:[%s214 + $0xf0] sm:$0xff] %v2297
        %2448 = vst [vmem:[%s214 + $0xf8] sm:$0xff] %v2298
        %2449 = vst [vmem:[%s214 + $0x100] sm:$0xff] %v2299
        %2450 = vst [vmem:[%s214 + $0x108] sm:$0xff] %v2300
        %2451 = vst [vmem:[%s214 + $0x110] sm:$0xff] %v2301
        %2452 = vst [vmem:[%s214 + $0x118] sm:$0xff] %v2302
        %2453 = vst [vmem:[%s214 + $0x120] sm:$0xff] %v2303
        %2454 = vst [vmem:[%s214 + $0x128] sm:$0xff] %v2304
        %2455 = vst [vmem:[%s214 + $0x130] sm:$0xff] %v2305
        %2456 = vst [vmem:[%s214 + $0x138] sm:$0xff] %v2306
        %2457 = vst [vmem:[%s214 + $0x140] sm:$0xff] %v2307
        %2458 = vst [vmem:[%s214 + $0x148] sm:$0xff] %v2308
        %2459 = vst [vmem:[%s214 + $0x150] sm:$0xff] %v2309
        %2460 = vst [vmem:[%s214 + $0x158] sm:$0xff] %v2310
        %2461 = vst [vmem:[%s214 + $0x160] sm:$0xff] %v2311
        %2462 = vst [vmem:[%s214 + $0x168] sm:$0xff] %v2312
        %2463 = vst [vmem:[%s214 + $0x170] sm:$0xff] %v2313
        %2464 = vst [vmem:[%s214 + $0x178] sm:$0xff] %v2314
        %2465 = vst [vmem:[%s214 + $0x180] sm:$0xff] %v2315
        %2466 = vst [vmem:[%s214 + $0x188] sm:$0xff] %v2316
        %2467 = vst [vmem:[%s214 + $0x190] sm:$0xff] %v2317
        %2468 = vst [vmem:[%s214 + $0x198] sm:$0xff] %v2318
        %2469 = vst [vmem:[%s214 + $0x1a0] sm:$0xff] %v2319
        %2470 = vst [vmem:[%s214 + $0x1a8] sm:$0xff] %v2320
        %2471 = vst [vmem:[%s214 + $0x1b0] sm:$0xff] %v2321
        %2472 = vst [vmem:[%s214 + $0x1b8] sm:$0xff] %v2322
        %2473 = vst [vmem:[%s214 + $0x1c0] sm:$0xff] %v2323
        %2474 = vst [vmem:[%s214 + $0x1c8] sm:$0xff] %v2324
        %2475 = vst [vmem:[%s214 + $0x1d0] sm:$0xff] %v2325
        %2476 = vst [vmem:[%s214 + $0x1d8] sm:$0xff] %v2326
        %2477 = vst [vmem:[%s214 + $0x1e0] sm:$0xff] %v2327
        %2478 = vst [vmem:[%s214 + $0x1e8] sm:$0xff] %v2328
        %2479 = vst [vmem:[%s214 + $0x1f0] sm:$0xff] %v2329
        %2480 = vst [vmem:[%s214 + $0x1f8] sm:$0xff] %v2330
        %2481 = vst [vmem:[%s214 + $0x200] sm:$0xff] %v2331
        %2482 = vst [vmem:[%s214 + $0x208] sm:$0xff] %v2332
        %2483 = vst [vmem:[%s214 + $0x210] sm:$0xff] %v2333
        %2484 = vst [vmem:[%s214 + $0x218] sm:$0xff] %v2334
        %2485 = vst [vmem:[%s214 + $0x220] sm:$0xff] %v2335
        %2486 = vst [vmem:[%s214 + $0x228] sm:$0xff] %v2336
        %2487 = vst [vmem:[%s214 + $0x230] sm:$0xff] %v2337
        %2488 = vst [vmem:[%s214 + $0x238] sm:$0xff] %v2338
        %2489 = vst [vmem:[%s214 + $0x240] sm:$0xff] %v2339
        %2490 = vst [vmem:[%s214 + $0x248] sm:$0xff] %v2340
        %2491 = vst [vmem:[%s214 + $0x250] sm:$0xff] %v2341
        %2492 = vst [vmem:[%s214 + $0x258] sm:$0xff] %v2342
        %2493 = vst [vmem:[%s214 + $0x260] sm:$0xff] %v2343
        %2494 = vst [vmem:[%s214 + $0x268] sm:$0xff] %v2344
        %2495 = vst [vmem:[%s214 + $0x270] sm:$0xff] %v2345
        %2496 = vst [vmem:[%s214 + $0x278] sm:$0xff] %v2346
        %2497 = vst [vmem:[%s214 + $0x280] sm:$0xff] %v2347
        %2498 = vst [vmem:[%s214 + $0x288] sm:$0xff] %v2348
        %2499 = vst [vmem:[%s214 + $0x290] sm:$0xff] %v2349
        %2500 = vst [vmem:[%s214 + $0x298] sm:$0xff] %v2350
        %2501 = vst [vmem:[%s214 + $0x2a0] sm:$0xff] %v2351
        %2502 = vst [vmem:[%s214 + $0x2a8] sm:$0xff] %v2352
        %2503 = vst [vmem:[%s214 + $0x2b0] sm:$0xff] %v2353
        %2504 = vst [vmem:[%s214 + $0x2b8] sm:$0xff] %v2354
        %2505 = vst [vmem:[%s214 + $0x2c0] sm:$0xff] %v2355
        %2506 = vst [vmem:[%s214 + $0x2c8] sm:$0xff] %v2356
        %2507 = vst [vmem:[%s214 + $0x2d0] sm:$0xff] %v2357
        %2508 = vst [vmem:[%s214 + $0x2d8] sm:$0xff] %v2358
        %2509 = vst [vmem:[%s214 + $0x2e0] sm:$0xff] %v2359
        %2510 = vst [vmem:[%s214 + $0x2e8] sm:$0xff] %v2360
        %2511 = vst [vmem:[%s214 + $0x2f0] sm:$0xff] %v2361
        %2512 = vst [vmem:[%s214 + $0x2f8] sm:$0xff] %v2362
        %2513 = vst [vmem:[%s214 + $0x300] sm:$0xff] %v2363
        %2514 = vst [vmem:[%s214 + $0x308] sm:$0xff] %v2364
        %2515 = vst [vmem:[%s214 + $0x310] sm:$0xff] %v2365
        %2516 = vst [vmem:[%s214 + $0x318] sm:$0xff] %v2366
        %2517 = vst [vmem:[%s214 + $0x320] sm:$0xff] %v2367
        %2518 = vst [vmem:[%s214 + $0x328] sm:$0xff] %v2368
        %2519 = vst [vmem:[%s214 + $0x330] sm:$0xff] %v2369
        %2520 = vst [vmem:[%s214 + $0x338] sm:$0xff] %v2370
        %2521 = vst [vmem:[%s214 + $0x340] sm:$0xff] %v2371
        %2522 = vst [vmem:[%s214 + $0x348] sm:$0xff] %v2372
        %2523 = vst [vmem:[%s214 + $0x350] sm:$0xff] %v2373
        %2524 = vst [vmem:[%s214 + $0x358] sm:$0xff] %v2374
        %2525 = vst [vmem:[%s214 + $0x360] sm:$0xff] %v2375
        %2526 = vst [vmem:[%s214 + $0x368] sm:$0xff] %v2376
        %2527 = vst [vmem:[%s214 + $0x370] sm:$0xff] %v2377
        %2528 = vst [vmem:[%s214 + $0x378] sm:$0xff] %v2378
        %2529 = vst [vmem:[%s214 + $0x380] sm:$0xff] %v2379
        %2530 = vst [vmem:[%s214 + $0x388] sm:$0xff] %v2380
        %2531 = vst [vmem:[%s214 + $0x390] sm:$0xff] %v2381
        %2532 = vst [vmem:[%s214 + $0x398] sm:$0xff] %v2382
        %2533 = vst [vmem:[%s214 + $0x3a0] sm:$0xff] %v2383
        %2534 = vst [vmem:[%s214 + $0x3a8] sm:$0xff] %v2384
        %2535 = vst [vmem:[%s214 + $0x3b0] sm:$0xff] %v2385
        %2536 = vst [vmem:[%s214 + $0x3b8] sm:$0xff] %v2386
        %2537 = vst [vmem:[%s214 + $0x3c0] sm:$0xff] %v2387
        %2538 = vst [vmem:[%s214 + $0x3c8] sm:$0xff] %v2388
        %2539 = vst [vmem:[%s214 + $0x3d0] sm:$0xff] %v2389
        %2540 = vst [vmem:[%s214 + $0x3d8] sm:$0xff] %v2390
        %2541 = vst [vmem:[%s214 + $0x3e0] sm:$0xff] %v2391
        %2542 = vst [vmem:[%s214 + $0x3e8] sm:$0xff] %v2392
        %2543 = vst [vmem:[%s214 + $0x3f0] sm:$0xff] %v2393
        %2544 = vst [vmem:[%s214 + $0x3f8] sm:$0xff] %v2394
        %2545 = vst [vmem:[%s214 + $0x400] sm:$0xff] %v2395
        %2546 = vst [vmem:[%s214 + $0x408] sm:$0xff] %v2396
        %2547 = vst [vmem:[%s214 + $0x410] sm:$0xff] %v2397
        %2548 = vst [vmem:[%s214 + $0x418] sm:$0xff] %v2398
        %2549 = vst [vmem:[%s214 + $0x420] sm:$0xff] %v2399
        %2550 = vst [vmem:[%s214 + $0x428] sm:$0xff] %v2400
        %2551 = vst [vmem:[%s214 + $0x430] sm:$0xff] %v2401
        %2552 = vst [vmem:[%s214 + $0x438] sm:$0xff] %v2402
        %2553 = vst [vmem:[%s214 + $0x440] sm:$0xff] %v2403
        %2554 = vst [vmem:[%s214 + $0x448] sm:$0xff] %v2404
        %2555 = vst [vmem:[%s214 + $0x450] sm:$0xff] %v2405
        %2556 = vst [vmem:[%s214 + $0x458] sm:$0xff] %v2406
        %2557 = vst [vmem:[%s214 + $0x460] sm:$0xff] %v2407
        %2558 = vst [vmem:[%s214 + $0x468] sm:$0xff] %v2408
        %2559 = vst [vmem:[%s214 + $0x470] sm:$0xff] %v2409
        %2560 = vst [vmem:[%s214 + $0x478] sm:$0xff] %v2410
        %2561 = vst [vmem:[%s214 + $0x480] sm:$0xff] %v2411
        %2562 = vst [vmem:[%s214 + $0x488] sm:$0xff] %v2412
        %2563 = vst [vmem:[%s214 + $0x490] sm:$0xff] %v2413
        %2564 = vst [vmem:[%s214 + $0x498] sm:$0xff] %v2414
        %2565 = vst [vmem:[%s214 + $0x4a0] sm:$0xff] %v2415
        %2566 = vst [vmem:[%s214 + $0x4a8] sm:$0xff] %v2416
        %s2567 = sand.u32 %s97, 1
        %s2568 = scalar_lea.sflag [#allocation4], %s2567
        %s2569 = sand.u32 %s97, 1
        %s2570 = smul.addr %s2569, 1200
        %s2571 = scalar_lea.vmem [#allocation8], %s2570
        // Predicated region
        $region45: #{tpu_custom_call.1} parent=31 // pred_check
          %p2572 = pneg %p107
        $region46: #{tpu_custom_call.1} parent=31 // pred_check_branch
          %2574 = sbr.rel (%p2572) target = $region48
        $region47: #{tpu_custom_call.1} parent=31 // pred_region
          %s2575 = smul.u32 75, %s21
          %s2577 = ssub.s32 19200, 19200
          %2578 = vsyncadd %s2568, %s2577
          %s2579 = smul.addr %s2575, 2
          %s2580 = smul.addr %s2579, 128
          %s2581 = scalar_lea.hbm %s3, %s2580
          %s2582 = sshll.u32 %s2571, 4
          %s2583 = int_to_ptr.vmem [resolvable:$true] %s2582
          %2588 = dma.vmem_to_hbm [thread:$0]  %s2583, 19200, %s2581, %s2568, 256, 256, 16
        $region48: #{tpu_custom_call.1} parent=31 // pred_fallthru
          _
      $region32: #{tpu_custom_call.1} parent=5 // pred_fallthru
        _
      %p2589 = scmp.le.s32.totalorder 2, %s16
      // Predicated region
      $region49: #{tpu_custom_call.1} parent=5 // pred_check
        %p2590 = pneg %p2589
      $region50: #{tpu_custom_call.1} parent=5 // pred_check_branch
        %2592 = sbr.rel (%p2590) target = $region52
      $region51: #{tpu_custom_call.1} parent=5 // pred_region
        %s2593 = ssub.s32 %s16, 2
        // Predicated region
        $region53: #{tpu_custom_call.1} parent=51 // pred_check
          %p2594 = pneg %p113
        $region54: #{tpu_custom_call.1} parent=51 // pred_check_branch
          %2596 = sbr.rel (%p2594) target = $region56
        $region55: #{tpu_custom_call.1} parent=51 // pred_region
          %s2597 = sand.u32 %s98, 1
          %s2598 = scalar_lea.sflag [#allocation4], %s2597
          %s2599 = sand.u32 %s98, 1
          %s2600 = smul.addr %s2599, 1200
          %s2601 = scalar_lea.vmem [#allocation8], %s2600
          %2602 = dma.done %s2598, 19200
        $region56: #{tpu_custom_call.1} parent=51 // pred_fallthru
          _
      $region52: #{tpu_custom_call.1} parent=5 // pred_fallthru
        _
    $region6: #{tpu_custom_call.1} parent=1 // loop_footer
      %s20 = sadd.s32 1, %s16
    $region7: #{tpu_custom_call.1} parent=1 // loop_footer_branch
      %15 = sbr.rel target = $region3
    $region8: #{tpu_custom_call.1} parent=1 // loop_exit
      _
    %2603 = vsyncpa [#allocation3], 1
    %s2604 = scalar_lea.sflag [#allocation3], 1
    %2605 = vsyncpa %s2604, 1
    %2606 = vsyncpa [#allocation6], 1
    %2607 = vsyncpa [#allocation4], 1
    %s2608 = scalar_lea.sflag [#allocation4], 1
    %2609 = vsyncpa %s2608, 1

</llo_original>
